<compile_context>
chip_gen: v7x
topology: tpu7x:2x2x1
jax: 0.10.0
libtpu: 0.0.40
codegen_flags: <defaults>
</compile_context>

<pallas_src>
import jax
import jax.numpy as jnp
from jax.experimental import pallas as pl
from jax.experimental.pallas import tpu as pltpu

EPS = 1e-5  # PyTorch nn.LayerNorm default eps


def _round_up(x, m):
    return ((x + m - 1) // m) * m


def _round_down(x, m):
    return (x // m) * m


def _layer_norm_f32(x_ref, g_ref, beta_ref):
    x = x_ref[...].astype(jnp.float32)
    mean = jnp.mean(x, axis=-1, keepdims=True)
    var = jnp.mean((x - mean) ** 2, axis=-1, keepdims=True)
    xn = (x - mean) * jax.lax.rsqrt(var + EPS)
    return xn * g_ref[...].astype(jnp.float32) + beta_ref[...].astype(jnp.float32)


def ffn_kernel_resident(x_ref, g_ref, beta_ref, w1_ref, b1_ref, w2_ref, b2_ref, o_ref):
    """Weights fully VMEM-resident: one grid axis over row tiles."""
    xn = _layer_norm_f32(x_ref, g_ref, beta_ref).astype(w1_ref.dtype)
    h = jnp.dot(xn, w1_ref[...], preferred_element_type=jnp.float32)
    h = jnp.maximum(h + b1_ref[...].astype(jnp.float32), 0.0)
    # Cast before the second matmul (halves vreg/VMEM pressure of the tm x H tile).
    out = jnp.dot(h.astype(w2_ref.dtype), w2_ref[...], preferred_element_type=jnp.float32)
    o_ref[...] = (out + b2_ref[...].astype(jnp.float32)).astype(o_ref.dtype)


def ffn_kernel_chunked(x_ref, g_ref, beta_ref, w1_ref, b1_ref, w2_ref, b2_ref,
                       o_ref, acc_ref, xn_ref):
    """Hidden dim chunked over the LAST grid axis (must stay 'arbitrary'/innermost)."""
    k = pl.program_id(1)

    @pl.when(k == 0)
    def _():
        xn_ref[...] = _layer_norm_f32(x_ref, g_ref, beta_ref).astype(xn_ref.dtype)
        acc_ref[...] = jnp.zeros_like(acc_ref)

    h = jnp.dot(xn_ref[...], w1_ref[...], preferred_element_type=jnp.float32)
    h = jnp.maximum(h + b1_ref[...].astype(jnp.float32), 0.0)
    acc_ref[...] += jnp.dot(h.astype(w2_ref.dtype), w2_ref[...],
                            preferred_element_type=jnp.float32)

    @pl.when(k == pl.num_programs(1) - 1)
    def _():
        o_ref[...] = (acc_ref[...] + b2_ref[...].astype(jnp.float32)).astype(o_ref.dtype)


def feed_forward(x, gamma, beta, w1, b1, w2, b2, *,
                 tm=1024, hk=None, matmul_dtype=jnp.bfloat16):
    """x: (B, S, D). w1: (D, H), w2: (H, D). Returns (B, S, D)."""
    B, S, D = x.shape
    H = w1.shape[1]
    M = B * S

    xbytes = jnp.dtype(x.dtype).itemsize
    obytes = xbytes
    wbytes = jnp.dtype(matmul_dtype).itemsize

    # ---- generation-aware VMEM budget (v5e/v6e: 128 MiB, v7x: 64 MiB) -----
    try:
        vmem_cap = int(getattr(pltpu.get_tpu_info(), "vmem_capacity_bytes", 64 * 2**20))
    except Exception:  # conservative fallback if the query is unavailable
        vmem_cap = 64 * 2**20
    vmem_budget = int(vmem_cap * 0.82)  # leave compiler-internal-scratch headroom

    M8 = _round_up(M, 8)
    H128 = _round_up(H, 128)

    def vmem_needed(tm_, hk_):
        weights = 2 * (D * hk_ + hk_ * D) * wbytes            # W1 + W2 (double-buffered)
        small = 2 * (3 * D * 4 + hk_ * 4)                     # gamma/beta/b2 + b1 chunk
        act = 2 * tm_ * D * xbytes + 2 * tm_ * D * obytes     # x / out pipeline buffers
        act += tm_ * hk_ * 4                                  # matmul-1 / ReLU intermediate
        act += tm_ * D * 4                                    # LN f32 temp or accumulator
        act += tm_ * D * wbytes                               # xn in matmul dtype
        return weights + small + act

    # ---- row tile selection -------------------------------------------------
    tm = max(8, min(_round_up(tm, 8), M8))
    # Megacore: keep at least two row tiles when there is enough work (v7x: 2 TCs).
    if M8 >= 512:
        tm = min(tm, max(256, _round_down(M8 // 2, 8)))
    # Bound padding waste to ~12.5% of real rows.
    while tm > 64 and (_round_up(M, tm) - M) * 8 > M:
        tm = max(64, _round_down(tm // 2, 8))

    # ---- path selection: weight-resident vs. hidden-chunked ----------------
    user_hk = hk
    resident = user_hk is None and vmem_needed(min(tm, 256), H128) <= vmem_budget

    if resident:
        hk = H128
        while vmem_needed(tm, hk) > vmem_budget and tm > 64:
            tm = max(64, _round_down(tm // 2, 8))
        if vmem_needed(tm, hk) > vmem_budget:
            resident = False  # weights too large even at tm=64 -> chunk hidden dim

    if not resident:
        hk = min(H128, 512) if user_hk is None else max(128, min(_round_up(user_hk, 128), H128))
        while vmem_needed(tm, hk) > vmem_budget and tm > 64:
            tm = max(64, _round_down(tm // 2, 8))
        while vmem_needed(tm, hk) > vmem_budget and hk > 128:
            hk = max(128, _round_down(hk // 2, 128))

    M_pad = _round_up(M, tm)
    H_pad = _round_up(H, hk)
    n_row_tiles = M_pad // tm
    nk = H_pad // hk

    # ---- operand prep (x stays in its native dtype; no f32 upcast) ---------
    x2 = x.reshape(M, D)
    if M_pad != M:
        x2 = jnp.pad(x2, ((0, M_pad - M), (0, 0)))   # LN(0-row)=beta, finite, sliced off

    w1p = w1.astype(matmul_dtype)
    w2p = w2.astype(matmul_dtype)
    b1p = b1.astype(jnp.float32)
    if H_pad != H:
        w1p = jnp.pad(w1p, ((0, 0), (0, H_pad - H)))
        w2p = jnp.pad(w2p, ((0, H_pad - H), (0, 0)))
        b1p = jnp.pad(b1p, ((0, H_pad - H),))        # relu(0)=0 and W2 pad rows are 0

    g2 = gamma.reshape(1, D).astype(jnp.float32)
    be2 = beta.reshape(1, D).astype(jnp.float32)
    b1_2 = b1p.reshape(1, H_pad)
    b2_2 = b2.reshape(1, D).astype(jnp.float32)

    needed = vmem_needed(tm, hk)
    vmem_limit = int(min(max(needed * 13 // 10, 32 * 2**20), vmem_budget))

    # Weight bytes are streamed once when resident / nk==1, else once per row tile.
    weight_stream = 2 * D * H_pad * wbytes * (1 if (resident or nk == 1) else n_row_tiles)
    cost = pl.CostEstimate(
        flops=4 * M_pad * D * H_pad + 10 * M_pad * D,
        transcendentals=M_pad,                                      # rsqrt per row
        bytes_accessed=M_pad * D * (xbytes + obytes) + weight_stream + (3 * D + H_pad) * 4,
    )

    if resident or nk == 1:
        # Constant block indices for W1/W2/b1 => fetched once, VMEM-resident.
        grid_spec = pltpu.PrefetchScalarGridSpec(
            num_scalar_prefetch=0,
            grid=(n_row_tiles,),
            in_specs=[
                pl.BlockSpec((tm, D), lambda i: (i, 0)),        # x row tile
                pl.BlockSpec((1, D), lambda i: (0, 0)),         # gamma
                pl.BlockSpec((1, D), lambda i: (0, 0)),         # beta
                pl.BlockSpec((D, H_pad), lambda i: (0, 0)),     # W1 (resident)
                pl.BlockSpec((1, H_pad), lambda i: (0, 0)),     # b1 (resident)
                pl.BlockSpec((H_pad, D), lambda i: (0, 0)),     # W2 (resident)
                pl.BlockSpec((1, D), lambda i: (0, 0)),         # b2
            ],
            out_specs=pl.BlockSpec((tm, D), lambda i: (i, 0)),
        )
        kernel = ffn_kernel_resident
        dims = ("parallel",)
    else:
        grid_spec = pltpu.PrefetchScalarGridSpec(
            num_scalar_prefetch=0,
            grid=(n_row_tiles, nk),                              # hidden axis LAST
            in_specs=[
                pl.BlockSpec((tm, D), lambda i, k: (i, 0)),      # x row tile
                pl.BlockSpec((1, D), lambda i, k: (0, 0)),       # gamma
                pl.BlockSpec((1, D), lambda i, k: (0, 0)),       # beta
                pl.BlockSpec((D, hk), lambda i, k: (0, k)),      # W1 chunk
                pl.BlockSpec((1, hk), lambda i, k: (0, k)),      # b1 chunk
                pl.BlockSpec((hk, D), lambda i, k: (k, 0)),      # W2 chunk
                pl.BlockSpec((1, D), lambda i, k: (0, 0)),       # b2
            ],
            out_specs=pl.BlockSpec((tm, D), lambda i, k: (i, 0)),
            scratch_shapes=[
                pltpu.VMEM((tm, D), jnp.float32),    # output accumulator
                pltpu.VMEM((tm, D), matmul_dtype),   # cached LayerNorm(x)
            ],
        )
        kernel = ffn_kernel_chunked
        dims = ("parallel", "arbitrary")

    out = pl.pallas_call(
        kernel,
        out_shape=jax.ShapeDtypeStruct((M_pad, D), x.dtype),
        grid_spec=grid_spec,
        compiler_params=pltpu.CompilerParams(
            dimension_semantics=dims,
            vmem_limit_bytes=vmem_limit,
        ),
        cost_estimate=cost,
    )(x2, g2, be2, w1p, b1_2, w2p, b2_2)

    return out[:M].reshape(B, S, D)


def reference(x, gamma, beta, w1, b1, w2, b2):
    mean = jnp.mean(x, axis=-1, keepdims=True)
    var = jnp.mean((x - mean) ** 2, axis=-1, keepdims=True)
    xn = (x - mean) * jax.lax.rsqrt(var + EPS) * gamma + beta
    h = jnp.maximum(jnp.dot(xn, w1, precision=jax.lax.Precision.HIGHEST) + b1, 0.0)
    return jnp.dot(h, w2, precision=jax.lax.Precision.HIGHEST) + b2


if __name__ == "__main__":
    # Small but lane-aligned shapes: batch=2, seq=256, dim=128, hidden=512.
    B, S, D, H = 2, 256, 128, 512

    key = jax.random.PRNGKey(0)
    kx, kw1, kb1, kw2, kb2 = jax.random.split(key, 5)

    x = jax.random.normal(kx, (B, S, D), dtype=jnp.float32)

    gamma = jnp.ones((D,), dtype=jnp.float32)   # LayerNorm weight
    beta = jnp.zeros((D,), dtype=jnp.float32)   # LayerNorm bias
    w1 = jax.random.normal(kw1, (D, H), dtype=jnp.float32) * (1.0 / jnp.sqrt(D))
    b1 = jax.random.normal(kb1, (H,), dtype=jnp.float32) * 0.01
    w2 = jax.random.normal(kw2, (H, D), dtype=jnp.float32) * (1.0 / jnp.sqrt(H))
    b2 = jax.random.normal(kb2, (D,), dtype=jnp.float32) * 0.01

    ref = reference(x, gamma, beta, w1, b1, w2, b2)

    # Default (fast) path: weight-resident, bf16 MXU operands, f32 accumulation.
    out_bf16 = jax.block_until_ready(feed_forward(x, gamma, beta, w1, b1, w2, b2))
    assert out_bf16.shape == (B, S, D)
    assert jnp.allclose(out_bf16, ref, atol=3e-2, rtol=3e-2), "bf16 resident path mismatch"

    # Full-f32 path (tight tolerance) to validate the kernel structure exactly.
    out_f32 = jax.block_until_ready(
        feed_forward(x, gamma, beta, w1, b1, w2, b2, matmul_dtype=jnp.float32))
    assert jnp.allclose(out_f32, ref, atol=2e-3, rtol=2e-3), "f32 resident path mismatch"

    # Force the hidden-chunked fallback path (4 hidden chunks x 8 row tiles).
    out_chunk = jax.block_until_ready(
        feed_forward(x, gamma, beta, w1, b1, w2, b2, tm=64, hk=128))
    assert jnp.allclose(out_chunk, ref, atol=3e-2, rtol=3e-2), "bf16 chunked path mismatch"

    print("KERNEL_OK")
</pallas_src>

<mosaic_0001>
module attributes {stable_mosaic.version = 11 : i64} {
  func.func @ffn_kernel_resident(%arg0: i32, %arg1: memref<256x128xf32, #tpu.memory_space<vmem>>, %arg2: memref<1x128xf32, #tpu.memory_space<vmem>>, %arg3: memref<1x128xf32, #tpu.memory_space<vmem>>, %arg4: memref<128x512xbf16, #tpu.memory_space<vmem>>, %arg5: memref<1x512xf32, #tpu.memory_space<vmem>>, %arg6: memref<512x128xbf16, #tpu.memory_space<vmem>>, %arg7: memref<1x128xf32, #tpu.memory_space<vmem>>, %arg8: memref<256x128xf32, #tpu.memory_space<vmem>>) attributes {dimension_semantics = [#tpu.dimension_semantics<parallel>], iteration_bounds = array<i64: 2>, scalar_prefetch = 0 : i64, scratch_operands = 0 : i64, tpu.core_type = #tpu.core_type<tc>, window_params = [{transform_indices = @transform_0, window_bounds = array<i64: 256, 128>}, {pipeline_mode = #tpu.pipeline_mode<synchronous>, transform_indices = @transform_1, window_bounds = array<i64: 1, 128>}, {pipeline_mode = #tpu.pipeline_mode<synchronous>, transform_indices = @transform_2, window_bounds = array<i64: 1, 128>}, {pipeline_mode = #tpu.pipeline_mode<synchronous>, transform_indices = @transform_3, window_bounds = array<i64: 128, 512>}, {pipeline_mode = #tpu.pipeline_mode<synchronous>, transform_indices = @transform_4, window_bounds = array<i64: 1, 512>}, {pipeline_mode = #tpu.pipeline_mode<synchronous>, transform_indices = @transform_5, window_bounds = array<i64: 512, 128>}, {pipeline_mode = #tpu.pipeline_mode<synchronous>, transform_indices = @transform_6, window_bounds = array<i64: 1, 128>}, {transform_indices = @transform_7, window_bounds = array<i64: 256, 128>}]} {
    %c0 = arith.constant 0 : index
    %c0_0 = arith.constant 0 : index
    %0 = vector.load %arg1[%c0, %c0_0] : memref<256x128xf32, #tpu.memory_space<vmem>>, vector<256x128xf32>
    %cst = arith.constant dense<0.000000e+00> : vector<256xf32>
    %1 = vector.multi_reduction <add>, %0, %cst [1] : vector<256x128xf32> to vector<256xf32>
    %2 = vector.shape_cast %1 : vector<256xf32> to vector<256x1xf32>
    %cst_1 = arith.constant 1.280000e+02 : f32
    %3 = vector.broadcast %cst_1 : f32 to vector<256x1xf32>
    %4 = arith.divf %2, %3 : vector<256x1xf32>
    %5 = vector.broadcast %4 : vector<256x1xf32> to vector<256x128xf32>
    %6 = arith.subf %0, %5 : vector<256x128xf32>
    %7 = arith.mulf %6, %6 : vector<256x128xf32>
    %cst_2 = arith.constant dense<0.000000e+00> : vector<256xf32>
    %8 = vector.multi_reduction <add>, %7, %cst_2 [1] : vector<256x128xf32> to vector<256xf32>
    %9 = vector.shape_cast %8 : vector<256xf32> to vector<256x1xf32>
    %cst_3 = arith.constant 1.280000e+02 : f32
    %10 = vector.broadcast %cst_3 : f32 to vector<256x1xf32>
    %11 = arith.divf %9, %10 : vector<256x1xf32>
    %12 = vector.broadcast %4 : vector<256x1xf32> to vector<256x128xf32>
    %13 = arith.subf %0, %12 : vector<256x128xf32>
    %cst_4 = arith.constant 9.99999974E-6 : f32
    %14 = vector.broadcast %cst_4 : f32 to vector<256x1xf32>
    %15 = arith.addf %11, %14 : vector<256x1xf32>
    %16 = math.rsqrt %15 : vector<256x1xf32>
    %17 = vector.broadcast %16 : vector<256x1xf32> to vector<256x128xf32>
    %18 = arith.mulf %13, %17 : vector<256x128xf32>
    %c0_5 = arith.constant 0 : index
    %c0_6 = arith.constant 0 : index
    %19 = vector.load %arg2[%c0_5, %c0_6] : memref<1x128xf32, #tpu.memory_space<vmem>>, vector<1x128xf32>
    %20 = vector.broadcast %19 : vector<1x128xf32> to vector<256x128xf32>
    %21 = arith.mulf %18, %20 : vector<256x128xf32>
    %c0_7 = arith.constant 0 : index
    %c0_8 = arith.constant 0 : index
    %22 = vector.load %arg3[%c0_7, %c0_8] : memref<1x128xf32, #tpu.memory_space<vmem>>, vector<1x128xf32>
    %23 = vector.broadcast %22 : vector<1x128xf32> to vector<256x128xf32>
    %24 = arith.addf %21, %23 : vector<256x128xf32>
    %25 = arith.truncf %24 : vector<256x128xf32> to vector<256x128xbf16>
    %c0_9 = arith.constant 0 : index
    %c0_10 = arith.constant 0 : index
    %26 = vector.load %arg4[%c0_9, %c0_10] : memref<128x512xbf16, #tpu.memory_space<vmem>>, vector<128x512xbf16>
    %cst_11 = arith.constant dense<0.000000e+00> : vector<256x512xf32>
    %27 = tpu.matmul %25, %26, %cst_11 {dimension_numbers = #tpu.dot_dimension_numbers<[1], [0], [0], [1], [0, 0, 1, 1], [], []>} : vector<256x128xbf16>, vector<128x512xbf16>, vector<256x512xf32> -> vector<256x512xf32>
    %c0_12 = arith.constant 0 : index
    %c0_13 = arith.constant 0 : index
    %28 = vector.load %arg5[%c0_12, %c0_13] : memref<1x512xf32, #tpu.memory_space<vmem>>, vector<1x512xf32>
    %29 = vector.broadcast %28 : vector<1x512xf32> to vector<256x512xf32>
    %30 = arith.addf %27, %29 : vector<256x512xf32>
    %cst_14 = arith.constant 0.000000e+00 : f32
    %31 = vector.broadcast %cst_14 : f32 to vector<256x512xf32>
    %32 = arith.maximumf %30, %31 : vector<256x512xf32>
    %33 = arith.truncf %32 : vector<256x512xf32> to vector<256x512xbf16>
    %c0_15 = arith.constant 0 : index
    %c0_16 = arith.constant 0 : index
    %34 = vector.load %arg6[%c0_15, %c0_16] : memref<512x128xbf16, #tpu.memory_space<vmem>>, vector<512x128xbf16>
    %cst_17 = arith.constant dense<0.000000e+00> : vector<256x128xf32>
    %35 = tpu.matmul %33, %34, %cst_17 {dimension_numbers = #tpu.dot_dimension_numbers<[1], [0], [0], [1], [0, 0, 1, 1], [], []>} : vector<256x512xbf16>, vector<512x128xbf16>, vector<256x128xf32> -> vector<256x128xf32>
    %c0_18 = arith.constant 0 : index
    %c0_19 = arith.constant 0 : index
    %36 = vector.load %arg7[%c0_18, %c0_19] : memref<1x128xf32, #tpu.memory_space<vmem>>, vector<1x128xf32>
    %37 = vector.broadcast %36 : vector<1x128xf32> to vector<256x128xf32>
    %38 = arith.addf %35, %37 : vector<256x128xf32>
    %c0_20 = arith.constant 0 : index
    %c0_21 = arith.constant 0 : index
    %39 = vector.load %arg8[%c0_20, %c0_21] : memref<256x128xf32, #tpu.memory_space<vmem>>, vector<256x128xf32>
    tpu.vector_store %arg8[%c0_20, %c0_21], %38 {strides = array<i32>} : memref<256x128xf32, #tpu.memory_space<vmem>>, vector<256x128xf32>,
    return
  }
  func.func @transform_0(%arg0: i32) -> (i32, i32) {
    %c0_i32 = arith.constant 0 : i32
    %c0_i32_0 = arith.constant 0 : i32
    return %arg0, %c0_i32 : i32, i32
  }
  func.func @transform_1(%arg0: i32) -> (i32, i32) {
    %c0_i32 = arith.constant 0 : i32
    %c0_i32_0 = arith.constant 0 : i32
    %c0_i32_1 = arith.constant 0 : i32
    return %c0_i32, %c0_i32_0 : i32, i32
  }
  func.func @transform_2(%arg0: i32) -> (i32, i32) {
    %c0_i32 = arith.constant 0 : i32
    %c0_i32_0 = arith.constant 0 : i32
    %c0_i32_1 = arith.constant 0 : i32
    return %c0_i32, %c0_i32_0 : i32, i32
  }
  func.func @transform_3(%arg0: i32) -> (i32, i32) {
    %c0_i32 = arith.constant 0 : i32
    %c0_i32_0 = arith.constant 0 : i32
    %c0_i32_1 = arith.constant 0 : i32
    return %c0_i32, %c0_i32_0 : i32, i32
  }
  func.func @transform_4(%arg0: i32) -> (i32, i32) {
    %c0_i32 = arith.constant 0 : i32
    %c0_i32_0 = arith.constant 0 : i32
    %c0_i32_1 = arith.constant 0 : i32
    return %c0_i32, %c0_i32_0 : i32, i32
  }
  func.func @transform_5(%arg0: i32) -> (i32, i32) {
    %c0_i32 = arith.constant 0 : i32
    %c0_i32_0 = arith.constant 0 : i32
    %c0_i32_1 = arith.constant 0 : i32
    return %c0_i32, %c0_i32_0 : i32, i32
  }
  func.func @transform_6(%arg0: i32) -> (i32, i32) {
    %c0_i32 = arith.constant 0 : i32
    %c0_i32_0 = arith.constant 0 : i32
    %c0_i32_1 = arith.constant 0 : i32
    return %c0_i32, %c0_i32_0 : i32, i32
  }
  func.func @transform_7(%arg0: i32) -> (i32, i32) {
    %c0_i32 = arith.constant 0 : i32
    %c0_i32_0 = arith.constant 0 : i32
    return %arg0, %c0_i32 : i32, i32
  }
}

</mosaic_0001>

<llo_original>
// kernel: tpu_custom_call.1
$region0: #{tpu_custom_call.1}
  #allocation0 [shape = 'u32[]', space=smem, size = 0x4, offset = 0x4, fixed_abs, tag = 'smem constant byte address 0x4 - core index']
  #allocation1 [shape = 'u32[144,128]{1,0:T(1,128)}', space=vmem, size = 0x12000, scoped, tag = 'internal scratch']
  %s0 = inlined_call_operand.hbm [shape: f32[512,128], index: 0, kind: input, shape index: {}]
  %s1 = inlined_call_operand.vmem [shape: f32[1,128], index: 1, kind: input, shape index: {}]
  %s2 = inlined_call_operand.vmem [shape: f32[1,128], index: 2, kind: input, shape index: {}]
  %s3 = inlined_call_operand.hbm [shape: bf16[128,512], index: 3, kind: input, shape index: {}]
  %s4 = inlined_call_operand.vmem [shape: f32[1,512], index: 4, kind: input, shape index: {}]
  %s5 = inlined_call_operand.hbm [shape: bf16[512,128], index: 5, kind: input, shape index: {}]
  %s6 = inlined_call_operand.vmem [shape: f32[1,128], index: 6, kind: input, shape index: {}]
  %s7 = inlined_call_operand.hbm [shape: f32[512,128], index: 7, kind: output, shape index: {}]
  %s8 = sld [smem:[#allocation0]]
  $region73: #{tpu_custom_call.1} parent=0
    _
  %s10 = ssub.s32 1, %s8
  %s11 = scalar_select 0, %s10, %s8
  $region1: #{tpu_custom_call.1} parent=0
    #allocation2 [shape = 'u8[262144]{0}', space=vmem, size = 0x40000, scoped, tag = 'input window, operand 0']
    #allocation3 [shape = 's32[2]{0}', space=sflag, size = 0x8, scoped, tag = 'scoped memory for tpu_custom_call.1']
    #allocation4 [shape = 's32[2]{0}', space=sflag, size = 0x8, scoped, tag = 'scoped memory for tpu_custom_call.1']
    #allocation5 [shape = 'u8[131072]{0}', space=vmem, size = 0x20000, scoped, tag = 'input window, operand 3, single buffered']
    #allocation6 [shape = 's32[1]{0}', space=sflag, size = 0x4, scoped, tag = 'scoped memory for tpu_custom_call.1']
    #allocation7 [shape = 'u8[131072]{0}', space=vmem, size = 0x20000, scoped, tag = 'input window, operand 5, single buffered']
    #allocation8 [shape = 'u8[262144]{0}', space=vmem, size = 0x40000, scoped, tag = 'output window, operand 0']
    %12 = vsyncpa [#allocation3], 0
    %s13 = scalar_lea.sflag [#allocation3], 1
    %14 = vsyncpa %s13, 0
    %15 = vsyncpa [#allocation6], 0
    %16 = vsyncpa [#allocation4], 0
    %s17 = scalar_lea.sflag [#allocation4], 1
    %18 = vsyncpa %s17, 0
    loop: start=0, step=1, limit=4
    $region2: #{tpu_custom_call.1} parent=1 // loop_pre_header
      _
    $region3: #{tpu_custom_call.1} parent=1 // loop_header
      %s20 = sphi 0, %s24
      %p21 = scmp.ge.s32.totalorder %s20, 4
      %s30 = sphi 0, %s32
      %s33 = sphi 0, %s30
      %s34 = sphi 0, %s33
      %s50 = sphi 0, %s34
      %s54 = sphi 0, %s54
      %s56 = sphi 0, %s54
      %s57 = sphi 0, %s56
      %s71 = sphi 0, %s57
      %s75 = sphi 0, %s75
      %s77 = sphi 0, %s75
      %s78 = sphi 0, %s77
      %s92 = sphi 0, %s78
      %s96 = sphi 0, %s96
      %s98 = sphi 0, %s96
      %s99 = sphi 0, %s98
      %s113 = sphi 0, %s99
      %s117 = sphi 0, %s117
      %s119 = sphi 0, %s117
      %s120 = sphi 0, %s119
      %s134 = sphi 0, %s120
      %s138 = sphi 0, %s138
      %s140 = sphi 0, %s138
      %s141 = sphi 0, %s140
      %s155 = sphi 0, %s141
      %s159 = sphi 0, %s159
      %s161 = sphi 0, %s159
      %s162 = sphi 0, %s161
      %s176 = sphi 0, %s162
      %s182 = sphi 0, %s184
      %s185 = sphi 0, %s182
      %s186 = sphi 0, %s185
      %s202 = sphi 0, %s186
    $region4: #{tpu_custom_call.1} parent=1 // loop_header_branch
      %23 = sbr.rel (%p21) target = $region8
    $region5: #{tpu_custom_call.1} parent=1 // loop_body
      %s25 = ssub.s32 %s20, 1
      %s26 = ssub.s32 %s20, 2
      %s27 = sadd.s32 %s20, 1
      %s28 = ssub.s32 %s20, %s27
      %p29 = scmp.eq.s32.totalorder %s28, 0
      %s31 = sadd.s32 %s30, 1
      %s32 = scalar_select %p29, %s30, %s31
      %p35 = pneg %p29
      %p36 = scmp.eq.s32.totalorder %s20, 1
      %p37 = por %p35, %p36
      %p38 = scmp.ne.s32.totalorder %s30, %s33
      %p39 = scmp.eq.s32.totalorder %s20, 0
      %p40 = por %p38, %p39
      %p41 = scmp.ne.s32.totalorder %s30, %s33
      %p42 = scmp.eq.s32.totalorder %s25, 1
      %p43 = por %p41, %p42
      %p44 = scmp.ne.s32.totalorder %s33, %s34
      %p45 = scmp.eq.s32.totalorder %s25, 0
      %p46 = por %p44, %p45
      %p47 = scmp.ne.s32.totalorder %s33, %s34
      %p48 = scmp.eq.s32.totalorder %s26, 1
      %p49 = por %p47, %p48
      %p51 = scmp.ne.s32.totalorder %s34, %s50
      %p52 = scmp.eq.s32.totalorder %s26, 0
      %p53 = por %p51, %p52
      %s55 = sadd.s32 %s54, 1
      %p58 = scmp.eq.s32.totalorder %s20, 1
      %p59 = scmp.ne.s32.totalorder %s54, %s56
      %p60 = scmp.eq.s32.totalorder %s20, 0
      %p61 = por %p59, %p60
      %p62 = scmp.ne.s32.totalorder %s54, %s56
      %p63 = scmp.eq.s32.totalorder %s25, 1
      %p64 = por %p62, %p63
      %p65 = scmp.ne.s32.totalorder %s56, %s57
      %p66 = scmp.eq.s32.totalorder %s25, 0
      %p67 = por %p65, %p66
      %p68 = scmp.ne.s32.totalorder %s56, %s57
      %p69 = scmp.eq.s32.totalorder %s26, 1
      %p70 = por %p68, %p69
      %p72 = scmp.ne.s32.totalorder %s57, %s71
      %p73 = scmp.eq.s32.totalorder %s26, 0
      %p74 = por %p72, %p73
      %s76 = sadd.s32 %s75, 1
      %p79 = scmp.eq.s32.totalorder %s20, 1
      %p80 = scmp.ne.s32.totalorder %s75, %s77
      %p81 = scmp.eq.s32.totalorder %s20, 0
      %p82 = por %p80, %p81
      %p83 = scmp.ne.s32.totalorder %s75, %s77
      %p84 = scmp.eq.s32.totalorder %s25, 1
      %p85 = por %p83, %p84
      %p86 = scmp.ne.s32.totalorder %s77, %s78
      %p87 = scmp.eq.s32.totalorder %s25, 0
      %p88 = por %p86, %p87
      %p89 = scmp.ne.s32.totalorder %s77, %s78
      %p90 = scmp.eq.s32.totalorder %s26, 1
      %p91 = por %p89, %p90
      %p93 = scmp.ne.s32.totalorder %s78, %s92
      %p94 = scmp.eq.s32.totalorder %s26, 0
      %p95 = por %p93, %p94
      %s97 = sadd.s32 %s96, 1
      %p100 = scmp.eq.s32.totalorder %s20, 1
      %p101 = scmp.ne.s32.totalorder %s96, %s98
      %p102 = scmp.eq.s32.totalorder %s20, 0
      %p103 = por %p101, %p102
      %p104 = scmp.ne.s32.totalorder %s96, %s98
      %p105 = scmp.eq.s32.totalorder %s25, 1
      %p106 = por %p104, %p105
      %p107 = scmp.ne.s32.totalorder %s98, %s99
      %p108 = scmp.eq.s32.totalorder %s25, 0
      %p109 = por %p107, %p108
      %p110 = scmp.ne.s32.totalorder %s98, %s99
      %p111 = scmp.eq.s32.totalorder %s26, 1
      %p112 = por %p110, %p111
      %p114 = scmp.ne.s32.totalorder %s99, %s113
      %p115 = scmp.eq.s32.totalorder %s26, 0
      %p116 = por %p114, %p115
      %s118 = sadd.s32 %s117, 1
      %p121 = scmp.eq.s32.totalorder %s20, 1
      %p122 = scmp.ne.s32.totalorder %s117, %s119
      %p123 = scmp.eq.s32.totalorder %s20, 0
      %p124 = por %p122, %p123
      %p125 = scmp.ne.s32.totalorder %s117, %s119
      %p126 = scmp.eq.s32.totalorder %s25, 1
      %p127 = por %p125, %p126
      %p128 = scmp.ne.s32.totalorder %s119, %s120
      %p129 = scmp.eq.s32.totalorder %s25, 0
      %p130 = por %p128, %p129
      %p131 = scmp.ne.s32.totalorder %s119, %s120
      %p132 = scmp.eq.s32.totalorder %s26, 1
      %p133 = por %p131, %p132
      %p135 = scmp.ne.s32.totalorder %s120, %s134
      %p136 = scmp.eq.s32.totalorder %s26, 0
      %p137 = por %p135, %p136
      %s139 = sadd.s32 %s138, 1
      %p142 = scmp.eq.s32.totalorder %s20, 1
      %p143 = scmp.ne.s32.totalorder %s138, %s140
      %p144 = scmp.eq.s32.totalorder %s20, 0
      %p145 = por %p143, %p144
      %p146 = scmp.ne.s32.totalorder %s138, %s140
      %p147 = scmp.eq.s32.totalorder %s25, 1
      %p148 = por %p146, %p147
      %p149 = scmp.ne.s32.totalorder %s140, %s141
      %p150 = scmp.eq.s32.totalorder %s25, 0
      %p151 = por %p149, %p150
      %p152 = scmp.ne.s32.totalorder %s140, %s141
      %p153 = scmp.eq.s32.totalorder %s26, 1
      %p154 = por %p152, %p153
      %p156 = scmp.ne.s32.totalorder %s141, %s155
      %p157 = scmp.eq.s32.totalorder %s26, 0
      %p158 = por %p156, %p157
      %s160 = sadd.s32 %s159, 1
      %p163 = scmp.eq.s32.totalorder %s20, 1
      %p164 = scmp.ne.s32.totalorder %s159, %s161
      %p165 = scmp.eq.s32.totalorder %s20, 0
      %p166 = por %p164, %p165
      %p167 = scmp.ne.s32.totalorder %s159, %s161
      %p168 = scmp.eq.s32.totalorder %s25, 1
      %p169 = por %p167, %p168
      %p170 = scmp.ne.s32.totalorder %s161, %s162
      %p171 = scmp.eq.s32.totalorder %s25, 0
      %p172 = por %p170, %p171
      %p173 = scmp.ne.s32.totalorder %s161, %s162
      %p174 = scmp.eq.s32.totalorder %s26, 1
      %p175 = por %p173, %p174
      %p177 = scmp.ne.s32.totalorder %s162, %s176
      %p178 = scmp.eq.s32.totalorder %s26, 0
      %p179 = por %p177, %p178
      %s180 = ssub.s32 %s20, %s27
      %p181 = scmp.eq.s32.totalorder %s180, 0
      %s183 = sadd.s32 %s182, 1
      %s184 = scalar_select %p181, %s182, %s183
      %p187 = pneg %p181
      %p188 = scmp.eq.s32.totalorder %s20, 1
      %p189 = por %p187, %p188
      %p190 = scmp.ne.s32.totalorder %s182, %s185
      %p191 = scmp.eq.s32.totalorder %s20, 0
      %p192 = por %p190, %p191
      %p193 = scmp.ne.s32.totalorder %s182, %s185
      %p194 = scmp.eq.s32.totalorder %s25, 1
      %p195 = por %p193, %p194
      %p196 = scmp.ne.s32.totalorder %s185, %s186
      %p197 = scmp.eq.s32.totalorder %s25, 0
      %p198 = por %p196, %p197
      %p199 = scmp.ne.s32.totalorder %s185, %s186
      %p200 = scmp.eq.s32.totalorder %s26, 1
      %p201 = por %p199, %p200
      %p203 = scmp.ne.s32.totalorder %s186, %s202
      %p204 = scmp.eq.s32.totalorder %s26, 0
      %p205 = por %p203, %p204
      %p206 = scmp.le.s32.totalorder 1, %s20
      %p207 = scmp.lt.s32.totalorder %s20, 3
      %p208 = pnand %p206, %p207
      %p209 = pneg %p208
      // Predicated region
      $region9: #{tpu_custom_call.1} parent=5 // pred_check
        _
      $region10: #{tpu_custom_call.1} parent=5 // pred_check_branch
        %211 = sbr.rel (%p208) target = $region12
      $region11: #{tpu_custom_call.1} parent=5 // pred_region
        %s212 = ssub.s32 %s20, 1
        // Predicated region
        $region13: #{tpu_custom_call.1} parent=11 // pred_check
          %p213 = pneg %p67
        $region14: #{tpu_custom_call.1} parent=11 // pred_check_branch
          %215 = sbr.rel (%p213) target = $region16
        $region15: #{tpu_custom_call.1} parent=11 // pred_region
          _
        $region16: #{tpu_custom_call.1} parent=11 // pred_fallthru
          _
        // Predicated region
        $region17: #{tpu_custom_call.1} parent=11 // pred_check
          %p216 = pneg %p88
        $region18: #{tpu_custom_call.1} parent=11 // pred_check_branch
          %218 = sbr.rel (%p216) target = $region20
        $region19: #{tpu_custom_call.1} parent=11 // pred_region
          _
        $region20: #{tpu_custom_call.1} parent=11 // pred_fallthru
          _
        // Predicated region
        $region21: #{tpu_custom_call.1} parent=11 // pred_check
          %p219 = pneg %p109
        $region22: #{tpu_custom_call.1} parent=11 // pred_check_branch
          %221 = sbr.rel (%p219) target = $region24
        $region23: #{tpu_custom_call.1} parent=11 // pred_region
          %s223 = ssub.s32 4096, 4096
          %224 = vsyncadd [#allocation6], %s223
          %s225 = sshll.u32 [#allocation5], 4
          %s226 = int_to_ptr.vmem [resolvable:$true] %s225
          %231 = dma.hbm_to_vmem [thread:$0]  %s3, 4096, %s226, [#allocation6], 256, 256, 16
        $region24: #{tpu_custom_call.1} parent=11 // pred_fallthru
          _
        // Predicated region
        $region25: #{tpu_custom_call.1} parent=11 // pred_check
          %p232 = pneg %p130
        $region26: #{tpu_custom_call.1} parent=11 // pred_check_branch
          %234 = sbr.rel (%p232) target = $region28
        $region27: #{tpu_custom_call.1} parent=11 // pred_region
          _
        $region28: #{tpu_custom_call.1} parent=11 // pred_fallthru
          _
        // Predicated region
        $region29: #{tpu_custom_call.1} parent=11 // pred_check
          %p235 = pneg %p151
        $region30: #{tpu_custom_call.1} parent=11 // pred_check_branch
          %237 = sbr.rel (%p235) target = $region32
        $region31: #{tpu_custom_call.1} parent=11 // pred_region
          %s239 = ssub.s32 4096, 4096
          %240 = vsyncadd [#allocation6], %s239
          %s241 = sshll.u32 [#allocation7], 4
          %s242 = int_to_ptr.vmem [resolvable:$true] %s241
          %247 = dma.hbm_to_vmem [thread:$0]  %s5, 4096, %s242, [#allocation6], 64, 64, 4
        $region32: #{tpu_custom_call.1} parent=11 // pred_fallthru
          _
        // Predicated region
        $region33: #{tpu_custom_call.1} parent=11 // pred_check
          %p248 = pneg %p172
        $region34: #{tpu_custom_call.1} parent=11 // pred_check_branch
          %250 = sbr.rel (%p248) target = $region36
        $region35: #{tpu_custom_call.1} parent=11 // pred_region
          _
        $region36: #{tpu_custom_call.1} parent=11 // pred_fallthru
          _
      $region12: #{tpu_custom_call.1} parent=5 // pred_fallthru
        _
      %p251 = scmp.lt.s32.totalorder %s20, 2
      // Predicated region
      $region37: #{tpu_custom_call.1} parent=5 // pred_check
        %p252 = pneg %p251
      $region38: #{tpu_custom_call.1} parent=5 // pred_check_branch
        %254 = sbr.rel (%p252) target = $region40
      $region39: #{tpu_custom_call.1} parent=5 // pred_region
        // Predicated region
        $region41: #{tpu_custom_call.1} parent=39 // pred_check
          %p255 = pneg %p40
        $region42: #{tpu_custom_call.1} parent=39 // pred_check_branch
          %257 = sbr.rel (%p255) target = $region44
        $region43: #{tpu_custom_call.1} parent=39 // pred_region
          %s258 = sand.u32 %s30, 1
          %s259 = scalar_lea.sflag [#allocation3], %s258
          %s260 = sand.u32 %s30, 1
          %s261 = smul.addr %s260, 256
          %s262 = scalar_lea.vmem [#allocation2], %s261
          %s263 = smul.u32 32, %s20
          %s265 = ssub.s32 4096, 4096
          %266 = vsyncadd %s259, %s265
          %s267 = smul.addr %s263, 128
          %s268 = scalar_lea.hbm %s0, %s267
          %s269 = sshll.u32 %s262, 4
          %s270 = int_to_ptr.vmem [resolvable:$true] %s269
          %275 = dma.hbm_to_vmem [thread:$0]  %s268, 4096, %s270, %s259, 128, 128, 8
        $region44: #{tpu_custom_call.1} parent=39 // pred_fallthru
          _
      $region40: #{tpu_custom_call.1} parent=5 // pred_fallthru
        _
      %p276 = scmp.le.s32.totalorder 1, %s20
      %p277 = scmp.lt.s32.totalorder %s20, 3
      %p278 = pnand %p276, %p277
      %p279 = pneg %p278
      // Predicated region
      $region45: #{tpu_custom_call.1} parent=5 // pred_check
        _
      $region46: #{tpu_custom_call.1} parent=5 // pred_check_branch
        %281 = sbr.rel (%p278) target = $region48
      $region47: #{tpu_custom_call.1} parent=5 // pred_region
        %s282 = ssub.s32 %s20, 1
        %s283 = sand.u32 %s33, 1
        %s284 = scalar_lea.sflag [#allocation3], %s283
        %s285 = sand.u32 %s33, 1
        %s286 = smul.addr %s285, 256
        %s287 = scalar_lea.vmem [#allocation2], %s286
        // Predicated region
        $region49: #{tpu_custom_call.1} parent=47 // pred_check
          %p288 = pneg %p46
        $region50: #{tpu_custom_call.1} parent=47 // pred_check_branch
          %290 = sbr.rel (%p288) target = $region52
        $region51: #{tpu_custom_call.1} parent=47 // pred_region
          %291 = dma.done %s284, 4096
        $region52: #{tpu_custom_call.1} parent=47 // pred_fallthru
          _
        // Predicated region
        $region53: #{tpu_custom_call.1} parent=47 // pred_check
          %p292 = pneg %p109
        $region54: #{tpu_custom_call.1} parent=47 // pred_check_branch
          %294 = sbr.rel (%p292) target = $region56
        $region55: #{tpu_custom_call.1} parent=47 // pred_region
          %295 = dma.done [#allocation6], 4096
        $region56: #{tpu_custom_call.1} parent=47 // pred_fallthru
          _
        // Predicated region
        $region57: #{tpu_custom_call.1} parent=47 // pred_check
          %p296 = pneg %p151
        $region58: #{tpu_custom_call.1} parent=47 // pred_check_branch
          %298 = sbr.rel (%p296) target = $region60
        $region59: #{tpu_custom_call.1} parent=47 // pred_region
          %299 = dma.done [#allocation6], 4096
        $region60: #{tpu_custom_call.1} parent=47 // pred_fallthru
          _
        %s300 = sand.u32 %s33, 1
        %s301 = scalar_lea.sflag [#allocation3], %s300
        %s302 = sand.u32 %s33, 1
        %s303 = smul.addr %s302, 256
        %s304 = scalar_lea.vmem [#allocation2], %s303
        %p305 = pneg %p46
        %p306 = pneg %p43
        %p307 = pneg %p67
        %p308 = pneg %p64
        %p309 = pneg %p88
        %p310 = pneg %p85
        %p311 = pneg %p109
        %p312 = pneg %p106
        %p313 = pneg %p130
        %p314 = pneg %p127
        %p315 = pneg %p151
        %p316 = pneg %p148
        %p317 = pneg %p172
        %p318 = pneg %p169
        %p319 = pneg %p198
        %p320 = pneg %p195
        %s321 = sand.u32 %s185, 1
        %s322 = scalar_lea.sflag [#allocation4], %s321
        %s323 = sand.u32 %s185, 1
        %s324 = smul.addr %s323, 256
        %s325 = scalar_lea.vmem [#allocation8], %s324
        %s326 = smul.u32 32, %s25
        %s327 = smul.u32 32, %s25
        %v329 = vld [vmem:[%s287] sm:$0xff]
        %v330 = vld [vmem:[%s287 + $0x8] sm:$0xff]
        %v331 = vld [vmem:[%s287 + $0x10] sm:$0xff]
        %v332 = vld [vmem:[%s287 + $0x18] sm:$0xff]
        %v333 = vld [vmem:[%s287 + $0x20] sm:$0xff]
        %v334 = vld [vmem:[%s287 + $0x28] sm:$0xff]
        %v335 = vld [vmem:[%s287 + $0x30] sm:$0xff]
        %v336 = vld [vmem:[%s287 + $0x38] sm:$0xff]
        %v337 = vld [vmem:[%s287 + $0x40] sm:$0xff]
        %v338 = vld [vmem:[%s287 + $0x48] sm:$0xff]
        %v339 = vld [vmem:[%s287 + $0x50] sm:$0xff]
        %v340 = vld [vmem:[%s287 + $0x58] sm:$0xff]
        %v341 = vld [vmem:[%s287 + $0x60] sm:$0xff]
        %v342 = vld [vmem:[%s287 + $0x68] sm:$0xff]
        %v343 = vld [vmem:[%s287 + $0x70] sm:$0xff]
        %v344 = vld [vmem:[%s287 + $0x78] sm:$0xff]
        %v345 = vld [vmem:[%s287 + $0x80] sm:$0xff]
        %v346 = vld [vmem:[%s287 + $0x88] sm:$0xff]
        %v347 = vld [vmem:[%s287 + $0x90] sm:$0xff]
        %v348 = vld [vmem:[%s287 + $0x98] sm:$0xff]
        %v349 = vld [vmem:[%s287 + $0xa0] sm:$0xff]
        %v350 = vld [vmem:[%s287 + $0xa8] sm:$0xff]
        %v351 = vld [vmem:[%s287 + $0xb0] sm:$0xff]
        %v352 = vld [vmem:[%s287 + $0xb8] sm:$0xff]
        %v353 = vld [vmem:[%s287 + $0xc0] sm:$0xff]
        %v354 = vld [vmem:[%s287 + $0xc8] sm:$0xff]
        %v355 = vld [vmem:[%s287 + $0xd0] sm:$0xff]
        %v356 = vld [vmem:[%s287 + $0xd8] sm:$0xff]
        %v357 = vld [vmem:[%s287 + $0xe0] sm:$0xff]
        %v358 = vld [vmem:[%s287 + $0xe8] sm:$0xff]
        %v359 = vld [vmem:[%s287 + $0xf0] sm:$0xff]
        %v360 = vld [vmem:[%s287 + $0xf8] sm:$0xff]
        %361 = vadd.xlane.f32.xlu0 %v329
        %v362 = vpop.xlane.xlu0 %361
        %363 = vadd.xlane.f32.xlu0 %v330
        %v364 = vpop.xlane.xlu0 %363
        %365 = vadd.xlane.f32.xlu0 %v331
        %v366 = vpop.xlane.xlu0 %365
        %367 = vadd.xlane.f32.xlu0 %v332
        %v368 = vpop.xlane.xlu0 %367
        %369 = vadd.xlane.f32.xlu0 %v333
        %v370 = vpop.xlane.xlu0 %369
        %371 = vadd.xlane.f32.xlu0 %v334
        %v372 = vpop.xlane.xlu0 %371
        %373 = vadd.xlane.f32.xlu0 %v335
        %v374 = vpop.xlane.xlu0 %373
        %375 = vadd.xlane.f32.xlu0 %v336
        %v376 = vpop.xlane.xlu0 %375
        %377 = vadd.xlane.f32.xlu0 %v337
        %v378 = vpop.xlane.xlu0 %377
        %379 = vadd.xlane.f32.xlu0 %v338
        %v380 = vpop.xlane.xlu0 %379
        %381 = vadd.xlane.f32.xlu0 %v339
        %v382 = vpop.xlane.xlu0 %381
        %383 = vadd.xlane.f32.xlu0 %v340
        %v384 = vpop.xlane.xlu0 %383
        %385 = vadd.xlane.f32.xlu0 %v341
        %v386 = vpop.xlane.xlu0 %385
        %387 = vadd.xlane.f32.xlu0 %v342
        %v388 = vpop.xlane.xlu0 %387
        %389 = vadd.xlane.f32.xlu0 %v343
        %v390 = vpop.xlane.xlu0 %389
        %391 = vadd.xlane.f32.xlu0 %v344
        %v392 = vpop.xlane.xlu0 %391
        %393 = vadd.xlane.f32.xlu0 %v345
        %v394 = vpop.xlane.xlu0 %393
        %395 = vadd.xlane.f32.xlu0 %v346
        %v396 = vpop.xlane.xlu0 %395
        %397 = vadd.xlane.f32.xlu0 %v347
        %v398 = vpop.xlane.xlu0 %397
        %399 = vadd.xlane.f32.xlu0 %v348
        %v400 = vpop.xlane.xlu0 %399
        %401 = vadd.xlane.f32.xlu0 %v349
        %v402 = vpop.xlane.xlu0 %401
        %403 = vadd.xlane.f32.xlu0 %v350
        %v404 = vpop.xlane.xlu0 %403
        %405 = vadd.xlane.f32.xlu0 %v351
        %v406 = vpop.xlane.xlu0 %405
        %407 = vadd.xlane.f32.xlu0 %v352
        %v408 = vpop.xlane.xlu0 %407
        %409 = vadd.xlane.f32.xlu0 %v353
        %v410 = vpop.xlane.xlu0 %409
        %411 = vadd.xlane.f32.xlu0 %v354
        %v412 = vpop.xlane.xlu0 %411
        %413 = vadd.xlane.f32.xlu0 %v355
        %v414 = vpop.xlane.xlu0 %413
        %415 = vadd.xlane.f32.xlu0 %v356
        %v416 = vpop.xlane.xlu0 %415
        %417 = vadd.xlane.f32.xlu0 %v357
        %v418 = vpop.xlane.xlu0 %417
        %419 = vadd.xlane.f32.xlu0 %v358
        %v420 = vpop.xlane.xlu0 %419
        %421 = vadd.xlane.f32.xlu0 %v359
        %v422 = vpop.xlane.xlu0 %421
        %423 = vadd.xlane.f32.xlu0 %v360
        %v424 = vpop.xlane.xlu0 %423
        %v425 = vrcp.pop 128.0
        %v426 = vmul.f32 %v362, %v425
        %v427 = vmul.f32 %v364, %v425
        %v428 = vmul.f32 %v366, %v425
        %v429 = vmul.f32 %v368, %v425
        %v430 = vmul.f32 %v370, %v425
        %v431 = vmul.f32 %v372, %v425
        %v432 = vmul.f32 %v374, %v425
        %v433 = vmul.f32 %v376, %v425
        %v434 = vmul.f32 %v378, %v425
        %v435 = vmul.f32 %v380, %v425
        %v436 = vmul.f32 %v382, %v425
        %v437 = vmul.f32 %v384, %v425
        %v438 = vmul.f32 %v386, %v425
        %v439 = vmul.f32 %v388, %v425
        %v440 = vmul.f32 %v390, %v425
        %v441 = vmul.f32 %v392, %v425
        %v442 = vmul.f32 %v394, %v425
        %v443 = vmul.f32 %v396, %v425
        %v444 = vmul.f32 %v398, %v425
        %v445 = vmul.f32 %v400, %v425
        %v446 = vmul.f32 %v402, %v425
        %v447 = vmul.f32 %v404, %v425
        %v448 = vmul.f32 %v406, %v425
        %v449 = vmul.f32 %v408, %v425
        %v450 = vmul.f32 %v410, %v425
        %v451 = vmul.f32 %v412, %v425
        %v452 = vmul.f32 %v414, %v425
        %v453 = vmul.f32 %v416, %v425
        %v454 = vmul.f32 %v418, %v425
        %v455 = vmul.f32 %v420, %v425
        %v456 = vmul.f32 %v422, %v425
        %v457 = vmul.f32 %v424, %v425
        %v458 = vsub.f32 %v329, %v426
        %v459 = vsub.f32 %v330, %v427
        %v460 = vsub.f32 %v331, %v428
        %v461 = vsub.f32 %v332, %v429
        %v462 = vsub.f32 %v333, %v430
        %v463 = vsub.f32 %v334, %v431
        %v464 = vsub.f32 %v335, %v432
        %v465 = vsub.f32 %v336, %v433
        %v466 = vsub.f32 %v337, %v434
        %v467 = vsub.f32 %v338, %v435
        %v468 = vsub.f32 %v339, %v436
        %v469 = vsub.f32 %v340, %v437
        %v470 = vsub.f32 %v341, %v438
        %v471 = vsub.f32 %v342, %v439
        %v472 = vsub.f32 %v343, %v440
        %v473 = vsub.f32 %v344, %v441
        %v474 = vsub.f32 %v345, %v442
        %v475 = vsub.f32 %v346, %v443
        %v476 = vsub.f32 %v347, %v444
        %v477 = vsub.f32 %v348, %v445
        %v478 = vsub.f32 %v349, %v446
        %v479 = vsub.f32 %v350, %v447
        %v480 = vsub.f32 %v351, %v448
        %v481 = vsub.f32 %v352, %v449
        %v482 = vsub.f32 %v353, %v450
        %v483 = vsub.f32 %v354, %v451
        %v484 = vsub.f32 %v355, %v452
        %v485 = vsub.f32 %v356, %v453
        %v486 = vsub.f32 %v357, %v454
        %v487 = vsub.f32 %v358, %v455
        %v488 = vsub.f32 %v359, %v456
        %v489 = vsub.f32 %v360, %v457
        %v490 = vmul.f32 %v458, %v458
        %v491 = vmul.f32 %v459, %v459
        %v492 = vmul.f32 %v460, %v460
        %v493 = vmul.f32 %v461, %v461
        %v494 = vmul.f32 %v462, %v462
        %v495 = vmul.f32 %v463, %v463
        %v496 = vmul.f32 %v464, %v464
        %v497 = vmul.f32 %v465, %v465
        %v498 = vmul.f32 %v466, %v466
        %v499 = vmul.f32 %v467, %v467
        %v500 = vmul.f32 %v468, %v468
        %v501 = vmul.f32 %v469, %v469
        %v502 = vmul.f32 %v470, %v470
        %v503 = vmul.f32 %v471, %v471
        %v504 = vmul.f32 %v472, %v472
        %v505 = vmul.f32 %v473, %v473
        %v506 = vmul.f32 %v474, %v474
        %v507 = vmul.f32 %v475, %v475
        %v508 = vmul.f32 %v476, %v476
        %v509 = vmul.f32 %v477, %v477
        %v510 = vmul.f32 %v478, %v478
        %v511 = vmul.f32 %v479, %v479
        %v512 = vmul.f32 %v480, %v480
        %v513 = vmul.f32 %v481, %v481
        %v514 = vmul.f32 %v482, %v482
        %v515 = vmul.f32 %v483, %v483
        %v516 = vmul.f32 %v484, %v484
        %v517 = vmul.f32 %v485, %v485
        %v518 = vmul.f32 %v486, %v486
        %v519 = vmul.f32 %v487, %v487
        %v520 = vmul.f32 %v488, %v488
        %v521 = vmul.f32 %v489, %v489
        %522 = vadd.xlane.f32.xlu0 %v490
        %v523 = vpop.xlane.xlu0 %522
        %524 = vadd.xlane.f32.xlu0 %v491
        %v525 = vpop.xlane.xlu0 %524
        %526 = vadd.xlane.f32.xlu0 %v492
        %v527 = vpop.xlane.xlu0 %526
        %528 = vadd.xlane.f32.xlu0 %v493
        %v529 = vpop.xlane.xlu0 %528
        %530 = vadd.xlane.f32.xlu0 %v494
        %v531 = vpop.xlane.xlu0 %530
        %532 = vadd.xlane.f32.xlu0 %v495
        %v533 = vpop.xlane.xlu0 %532
        %534 = vadd.xlane.f32.xlu0 %v496
        %v535 = vpop.xlane.xlu0 %534
        %536 = vadd.xlane.f32.xlu0 %v497
        %v537 = vpop.xlane.xlu0 %536
        %538 = vadd.xlane.f32.xlu0 %v498
        %v539 = vpop.xlane.xlu0 %538
        %540 = vadd.xlane.f32.xlu0 %v499
        %v541 = vpop.xlane.xlu0 %540
        %542 = vadd.xlane.f32.xlu0 %v500
        %v543 = vpop.xlane.xlu0 %542
        %544 = vadd.xlane.f32.xlu0 %v501
        %v545 = vpop.xlane.xlu0 %544
        %546 = vadd.xlane.f32.xlu0 %v502
        %v547 = vpop.xlane.xlu0 %546
        %548 = vadd.xlane.f32.xlu0 %v503
        %v549 = vpop.xlane.xlu0 %548
        %550 = vadd.xlane.f32.xlu0 %v504
        %v551 = vpop.xlane.xlu0 %550
        %552 = vadd.xlane.f32.xlu0 %v505
        %v553 = vpop.xlane.xlu0 %552
        %554 = vadd.xlane.f32.xlu0 %v506
        %v555 = vpop.xlane.xlu0 %554
        %556 = vadd.xlane.f32.xlu0 %v507
        %v557 = vpop.xlane.xlu0 %556
        %558 = vadd.xlane.f32.xlu0 %v508
        %v559 = vpop.xlane.xlu0 %558
        %560 = vadd.xlane.f32.xlu0 %v509
        %v561 = vpop.xlane.xlu0 %560
        %562 = vadd.xlane.f32.xlu0 %v510
        %v563 = vpop.xlane.xlu0 %562
        %564 = vadd.xlane.f32.xlu0 %v511
        %v565 = vpop.xlane.xlu0 %564
        %566 = vadd.xlane.f32.xlu0 %v512
        %v567 = vpop.xlane.xlu0 %566
        %568 = vadd.xlane.f32.xlu0 %v513
        %v569 = vpop.xlane.xlu0 %568
        %570 = vadd.xlane.f32.xlu0 %v514
        %v571 = vpop.xlane.xlu0 %570
        %572 = vadd.xlane.f32.xlu0 %v515
        %v573 = vpop.xlane.xlu0 %572
        %574 = vadd.xlane.f32.xlu0 %v516
        %v575 = vpop.xlane.xlu0 %574
        %576 = vadd.xlane.f32.xlu0 %v517
        %v577 = vpop.xlane.xlu0 %576
        %578 = vadd.xlane.f32.xlu0 %v518
        %v579 = vpop.xlane.xlu0 %578
        %580 = vadd.xlane.f32.xlu0 %v519
        %v581 = vpop.xlane.xlu0 %580
        %582 = vadd.xlane.f32.xlu0 %v520
        %v583 = vpop.xlane.xlu0 %582
        %584 = vadd.xlane.f32.xlu0 %v521
        %v585 = vpop.xlane.xlu0 %584
        %v586 = vmul.f32 %v523, %v425
        %v587 = vmul.f32 %v525, %v425
        %v588 = vmul.f32 %v527, %v425
        %v589 = vmul.f32 %v529, %v425
        %v590 = vmul.f32 %v531, %v425
        %v591 = vmul.f32 %v533, %v425
        %v592 = vmul.f32 %v535, %v425
        %v593 = vmul.f32 %v537, %v425
        %v594 = vmul.f32 %v539, %v425
        %v595 = vmul.f32 %v541, %v425
        %v596 = vmul.f32 %v543, %v425
        %v597 = vmul.f32 %v545, %v425
        %v598 = vmul.f32 %v547, %v425
        %v599 = vmul.f32 %v549, %v425
        %v600 = vmul.f32 %v551, %v425
        %v601 = vmul.f32 %v553, %v425
        %v602 = vmul.f32 %v555, %v425
        %v603 = vmul.f32 %v557, %v425
        %v604 = vmul.f32 %v559, %v425
        %v605 = vmul.f32 %v561, %v425
        %v606 = vmul.f32 %v563, %v425
        %v607 = vmul.f32 %v565, %v425
        %v608 = vmul.f32 %v567, %v425
        %v609 = vmul.f32 %v569, %v425
        %v610 = vmul.f32 %v571, %v425
        %v611 = vmul.f32 %v573, %v425
        %v612 = vmul.f32 %v575, %v425
        %v613 = vmul.f32 %v577, %v425
        %v614 = vmul.f32 %v579, %v425
        %v615 = vmul.f32 %v581, %v425
        %v616 = vmul.f32 %v583, %v425
        %v617 = vmul.f32 %v585, %v425
        %v618 = vadd.f32 %v586, 1e-05
        %v619 = vadd.f32 %v587, 1e-05
        %v620 = vadd.f32 %v588, 1e-05
        %v621 = vadd.f32 %v589, 1e-05
        %v622 = vadd.f32 %v590, 1e-05
        %v623 = vadd.f32 %v591, 1e-05
        %v624 = vadd.f32 %v592, 1e-05
        %v625 = vadd.f32 %v593, 1e-05
        %v626 = vadd.f32 %v594, 1e-05
        %v627 = vadd.f32 %v595, 1e-05
        %v628 = vadd.f32 %v596, 1e-05
        %v629 = vadd.f32 %v597, 1e-05
        %v630 = vadd.f32 %v598, 1e-05
        %v631 = vadd.f32 %v599, 1e-05
        %v632 = vadd.f32 %v600, 1e-05
        %v633 = vadd.f32 %v601, 1e-05
        %v634 = vadd.f32 %v602, 1e-05
        %v635 = vadd.f32 %v603, 1e-05
        %v636 = vadd.f32 %v604, 1e-05
        %v637 = vadd.f32 %v605, 1e-05
        %v638 = vadd.f32 %v606, 1e-05
        %v639 = vadd.f32 %v607, 1e-05
        %v640 = vadd.f32 %v608, 1e-05
        %v641 = vadd.f32 %v609, 1e-05
        %v642 = vadd.f32 %v610, 1e-05
        %v643 = vadd.f32 %v611, 1e-05
        %v644 = vadd.f32 %v612, 1e-05
        %v645 = vadd.f32 %v613, 1e-05
        %v646 = vadd.f32 %v614, 1e-05
        %v647 = vadd.f32 %v615, 1e-05
        %v648 = vadd.f32 %v616, 1e-05
        %v649 = vadd.f32 %v617, 1e-05
        %v650 = vrsqrt.pop %v618
        %v651 = vrsqrt.pop %v619
        %v652 = vrsqrt.pop %v620
        %v653 = vrsqrt.pop %v621
        %v654 = vrsqrt.pop %v622
        %v655 = vrsqrt.pop %v623
        %v656 = vrsqrt.pop %v624
        %v657 = vrsqrt.pop %v625
        %v658 = vrsqrt.pop %v626
        %v659 = vrsqrt.pop %v627
        %v660 = vrsqrt.pop %v628
        %v661 = vrsqrt.pop %v629
        %v662 = vrsqrt.pop %v630
        %v663 = vrsqrt.pop %v631
        %v664 = vrsqrt.pop %v632
        %v665 = vrsqrt.pop %v633
        %v666 = vrsqrt.pop %v634
        %v667 = vrsqrt.pop %v635
        %v668 = vrsqrt.pop %v636
        %v669 = vrsqrt.pop %v637
        %v670 = vrsqrt.pop %v638
        %v671 = vrsqrt.pop %v639
        %v672 = vrsqrt.pop %v640
        %v673 = vrsqrt.pop %v641
        %v674 = vrsqrt.pop %v642
        %v675 = vrsqrt.pop %v643
        %v676 = vrsqrt.pop %v644
        %v677 = vrsqrt.pop %v645
        %v678 = vrsqrt.pop %v646
        %v679 = vrsqrt.pop %v647
        %v680 = vrsqrt.pop %v648
        %v681 = vrsqrt.pop %v649
        %v682 = vmul.f32 %v458, %v650
        %v683 = vmul.f32 %v459, %v651
        %v684 = vmul.f32 %v460, %v652
        %v685 = vmul.f32 %v461, %v653
        %v686 = vmul.f32 %v462, %v654
        %v687 = vmul.f32 %v463, %v655
        %v688 = vmul.f32 %v464, %v656
        %v689 = vmul.f32 %v465, %v657
        %v690 = vmul.f32 %v466, %v658
        %v691 = vmul.f32 %v467, %v659
        %v692 = vmul.f32 %v468, %v660
        %v693 = vmul.f32 %v469, %v661
        %v694 = vmul.f32 %v470, %v662
        %v695 = vmul.f32 %v471, %v663
        %v696 = vmul.f32 %v472, %v664
        %v697 = vmul.f32 %v473, %v665
        %v698 = vmul.f32 %v474, %v666
        %v699 = vmul.f32 %v475, %v667
        %v700 = vmul.f32 %v476, %v668
        %v701 = vmul.f32 %v477, %v669
        %v702 = vmul.f32 %v478, %v670
        %v703 = vmul.f32 %v479, %v671
        %v704 = vmul.f32 %v480, %v672
        %v705 = vmul.f32 %v481, %v673
        %v706 = vmul.f32 %v482, %v674
        %v707 = vmul.f32 %v483, %v675
        %v708 = vmul.f32 %v484, %v676
        %v709 = vmul.f32 %v485, %v677
        %v710 = vmul.f32 %v486, %v678
        %v711 = vmul.f32 %v487, %v679
        %v712 = vmul.f32 %v488, %v680
        %v713 = vmul.f32 %v489, %v681
        %v714 = vld [vmem:[%s1] sm:$0x1]
        %v716 = vlaneseq
        %v717 = vshrl.u32 %v716, 7
        %v718 = vsub.s32 0, %v717
        %v719 = vrot.slane %v714, %v718
        %v721 = vmul.f32 %v682, %v719
        %v722 = vmul.f32 %v683, %v719
        %v723 = vmul.f32 %v684, %v719
        %v724 = vmul.f32 %v685, %v719
        %v725 = vmul.f32 %v686, %v719
        %v726 = vmul.f32 %v687, %v719
        %v727 = vmul.f32 %v688, %v719
        %v728 = vmul.f32 %v689, %v719
        %v729 = vmul.f32 %v690, %v719
        %v730 = vmul.f32 %v691, %v719
        %v731 = vmul.f32 %v692, %v719
        %v732 = vmul.f32 %v693, %v719
        %v733 = vmul.f32 %v694, %v719
        %v734 = vmul.f32 %v695, %v719
        %v735 = vmul.f32 %v696, %v719
        %v736 = vmul.f32 %v697, %v719
        %v737 = vmul.f32 %v698, %v719
        %v738 = vmul.f32 %v699, %v719
        %v739 = vmul.f32 %v700, %v719
        %v740 = vmul.f32 %v701, %v719
        %v741 = vmul.f32 %v702, %v719
        %v742 = vmul.f32 %v703, %v719
        %v743 = vmul.f32 %v704, %v719
        %v744 = vmul.f32 %v705, %v719
        %v745 = vmul.f32 %v706, %v719
        %v746 = vmul.f32 %v707, %v719
        %v747 = vmul.f32 %v708, %v719
        %v748 = vmul.f32 %v709, %v719
        %v749 = vmul.f32 %v710, %v719
        %v750 = vmul.f32 %v711, %v719
        %v751 = vmul.f32 %v712, %v719
        %v752 = vmul.f32 %v713, %v719
        %v753 = vld [vmem:[%s2] sm:$0x1]
        %v755 = vlaneseq
        %v756 = vshrl.u32 %v755, 7
        %v757 = vsub.s32 0, %v756
        %v758 = vrot.slane %v753, %v757
        %v760 = vadd.f32 %v721, %v758
        %v761 = vadd.f32 %v722, %v758
        %v762 = vadd.f32 %v723, %v758
        %v763 = vadd.f32 %v724, %v758
        %v764 = vadd.f32 %v725, %v758
        %v765 = vadd.f32 %v726, %v758
        %v766 = vadd.f32 %v727, %v758
        %v767 = vadd.f32 %v728, %v758
        %v768 = vadd.f32 %v729, %v758
        %v769 = vadd.f32 %v730, %v758
        %v770 = vadd.f32 %v731, %v758
        %v771 = vadd.f32 %v732, %v758
        %v772 = vadd.f32 %v733, %v758
        %v773 = vadd.f32 %v734, %v758
        %v774 = vadd.f32 %v735, %v758
        %v775 = vadd.f32 %v736, %v758
        %v776 = vadd.f32 %v737, %v758
        %v777 = vadd.f32 %v738, %v758
        %v778 = vadd.f32 %v739, %v758
        %v779 = vadd.f32 %v740, %v758
        %v780 = vadd.f32 %v741, %v758
        %v781 = vadd.f32 %v742, %v758
        %v782 = vadd.f32 %v743, %v758
        %v783 = vadd.f32 %v744, %v758
        %v784 = vadd.f32 %v745, %v758
        %v785 = vadd.f32 %v746, %v758
        %v786 = vadd.f32 %v747, %v758
        %v787 = vadd.f32 %v748, %v758
        %v788 = vadd.f32 %v749, %v758
        %v789 = vadd.f32 %v750, %v758
        %v790 = vadd.f32 %v751, %v758
        %v791 = vadd.f32 %v752, %v758
        %v792 = vpack.c.bf16 %v761, %v760
        %v793 = vpack.c.bf16 %v763, %v762
        %v794 = vpack.c.bf16 %v765, %v764
        %v795 = vpack.c.bf16 %v767, %v766
        %v796 = vpack.c.bf16 %v769, %v768
        %v797 = vpack.c.bf16 %v771, %v770
        %v798 = vpack.c.bf16 %v773, %v772
        %v799 = vpack.c.bf16 %v775, %v774
        %v800 = vpack.c.bf16 %v777, %v776
        %v801 = vpack.c.bf16 %v779, %v778
        %v802 = vpack.c.bf16 %v781, %v780
        %v803 = vpack.c.bf16 %v783, %v782
        %v804 = vpack.c.bf16 %v785, %v784
        %v805 = vpack.c.bf16 %v787, %v786
        %v806 = vpack.c.bf16 %v789, %v788
        %v807 = vpack.c.bf16 %v791, %v790
        %v808 = vld [vmem:[#allocation5] sm:$0xff]
        %v809 = vld [vmem:[#allocation5 + $0x8] sm:$0xff]
        %v810 = vld [vmem:[#allocation5 + $0x10] sm:$0xff]
        %v811 = vld [vmem:[#allocation5 + $0x18] sm:$0xff]
        %v812 = vld [vmem:[#allocation5 + $0x20] sm:$0xff]
        %v813 = vld [vmem:[#allocation5 + $0x28] sm:$0xff]
        %v814 = vld [vmem:[#allocation5 + $0x30] sm:$0xff]
        %v815 = vld [vmem:[#allocation5 + $0x38] sm:$0xff]
        %v816 = vld [vmem:[#allocation5 + $0x40] sm:$0xff]
        %v817 = vld [vmem:[#allocation5 + $0x48] sm:$0xff]
        %v818 = vld [vmem:[#allocation5 + $0x50] sm:$0xff]
        %v819 = vld [vmem:[#allocation5 + $0x58] sm:$0xff]
        %v820 = vld [vmem:[#allocation5 + $0x60] sm:$0xff]
        %v821 = vld [vmem:[#allocation5 + $0x68] sm:$0xff]
        %v822 = vld [vmem:[#allocation5 + $0x70] sm:$0xff]
        %v823 = vld [vmem:[#allocation5 + $0x78] sm:$0xff]
        %v824 = vld [vmem:[#allocation5 + $0x80] sm:$0xff]
        %v825 = vld [vmem:[#allocation5 + $0x88] sm:$0xff]
        %v826 = vld [vmem:[#allocation5 + $0x90] sm:$0xff]
        %v827 = vld [vmem:[#allocation5 + $0x98] sm:$0xff]
        %v828 = vld [vmem:[#allocation5 + $0xa0] sm:$0xff]
        %v829 = vld [vmem:[#allocation5 + $0xa8] sm:$0xff]
        %v830 = vld [vmem:[#allocation5 + $0xb0] sm:$0xff]
        %v831 = vld [vmem:[#allocation5 + $0xb8] sm:$0xff]
        %v832 = vld [vmem:[#allocation5 + $0xc0] sm:$0xff]
        %v833 = vld [vmem:[#allocation5 + $0xc8] sm:$0xff]
        %v834 = vld [vmem:[#allocation5 + $0xd0] sm:$0xff]
        %v835 = vld [vmem:[#allocation5 + $0xd8] sm:$0xff]
        %v836 = vld [vmem:[#allocation5 + $0xe0] sm:$0xff]
        %v837 = vld [vmem:[#allocation5 + $0xe8] sm:$0xff]
        %v838 = vld [vmem:[#allocation5 + $0xf0] sm:$0xff]
        %v839 = vld [vmem:[#allocation5 + $0xf8] sm:$0xff]
        %v840 = vld [vmem:[%s4] sm:$0xf]
        %v842 = vlaneseq
        %v843 = vshrl.u32 %v842, 7
        %v844 = vsub.s32 0, %v843
        %v845 = vrot.slane %v840, %v844
        %v846 = vlaneseq
        %v847 = vshrl.u32 %v846, 7
        %v848 = vsub.s32 1, %v847
        %v849 = vrot.slane %v840, %v848
        %v850 = vlaneseq
        %v851 = vshrl.u32 %v850, 7
        %v852 = vsub.s32 2, %v851
        %v853 = vrot.slane %v840, %v852
        %v854 = vlaneseq
        %v855 = vshrl.u32 %v854, 7
        %v856 = vsub.s32 3, %v855
        %v857 = vrot.slane %v840, %v856
        %v894 = vunpack.c.l.b16 %v808
        %v895 = vunpack.c.h.b16 %v808
        %v896 = vunpack.c.l.b16 %v809
        %v897 = vunpack.c.h.b16 %v809
        %v898 = vunpack.c.l.b16 %v810
        %v899 = vunpack.c.h.b16 %v810
        %v900 = vunpack.c.l.b16 %v811
        %v901 = vunpack.c.h.b16 %v811
        %v902 = vunpack.c.l.b16 %v812
        %v903 = vunpack.c.h.b16 %v812
        %v904 = vunpack.c.l.b16 %v813
        %v905 = vunpack.c.h.b16 %v813
        %v906 = vunpack.c.l.b16 %v814
        %v907 = vunpack.c.h.b16 %v814
        %v908 = vunpack.c.l.b16 %v815
        %v909 = vunpack.c.h.b16 %v815
        %v910 = vunpack.c.l.b16 %v816
        %v911 = vunpack.c.h.b16 %v816
        %v912 = vunpack.c.l.b16 %v817
        %v913 = vunpack.c.h.b16 %v817
        %v914 = vunpack.c.l.b16 %v818
        %v915 = vunpack.c.h.b16 %v818
        %v916 = vunpack.c.l.b16 %v819
        %v917 = vunpack.c.h.b16 %v819
        %v918 = vunpack.c.l.b16 %v820
        %v919 = vunpack.c.h.b16 %v820
        %v920 = vunpack.c.l.b16 %v821
        %v921 = vunpack.c.h.b16 %v821
        %v922 = vunpack.c.l.b16 %v822
        %v923 = vunpack.c.h.b16 %v822
        %v924 = vunpack.c.l.b16 %v823
        %v925 = vunpack.c.h.b16 %v823
        %v926 = vunpack.c.l.b16 %v824
        %v927 = vunpack.c.h.b16 %v824
        %v928 = vunpack.c.l.b16 %v825
        %v929 = vunpack.c.h.b16 %v825
        %v930 = vunpack.c.l.b16 %v826
        %v931 = vunpack.c.h.b16 %v826
        %v932 = vunpack.c.l.b16 %v827
        %v933 = vunpack.c.h.b16 %v827
        %v934 = vunpack.c.l.b16 %v828
        %v935 = vunpack.c.h.b16 %v828
        %v936 = vunpack.c.l.b16 %v829
        %v937 = vunpack.c.h.b16 %v829
        %v938 = vunpack.c.l.b16 %v830
        %v939 = vunpack.c.h.b16 %v830
        %v940 = vunpack.c.l.b16 %v831
        %v941 = vunpack.c.h.b16 %v831
        %v942 = vunpack.c.l.b16 %v832
        %v943 = vunpack.c.h.b16 %v832
        %v944 = vunpack.c.l.b16 %v833
        %v945 = vunpack.c.h.b16 %v833
        %v946 = vunpack.c.l.b16 %v834
        %v947 = vunpack.c.h.b16 %v834
        %v948 = vunpack.c.l.b16 %v835
        %v949 = vunpack.c.h.b16 %v835
        %v950 = vunpack.c.l.b16 %v836
        %v951 = vunpack.c.h.b16 %v836
        %v952 = vunpack.c.l.b16 %v837
        %v953 = vunpack.c.h.b16 %v837
        %v954 = vunpack.c.l.b16 %v838
        %v955 = vunpack.c.h.b16 %v838
        %v956 = vunpack.c.l.b16 %v839
        %v957 = vunpack.c.h.b16 %v839
        %v958 = vpack.c.b16 %v898, %v894
        %v959 = vpack.c.b16 %v899, %v895
        %v960 = vpack.c.b16 %v900, %v896
        %v961 = vpack.c.b16 %v901, %v897
        %v962 = vpack.c.b16 %v906, %v902
        %v963 = vpack.c.b16 %v907, %v903
        %v964 = vpack.c.b16 %v908, %v904
        %v965 = vpack.c.b16 %v909, %v905
        %v966 = vpack.c.b16 %v914, %v910
        %v967 = vpack.c.b16 %v915, %v911
        %v968 = vpack.c.b16 %v916, %v912
        %v969 = vpack.c.b16 %v917, %v913
        %v970 = vpack.c.b16 %v922, %v918
        %v971 = vpack.c.b16 %v923, %v919
        %v972 = vpack.c.b16 %v924, %v920
        %v973 = vpack.c.b16 %v925, %v921
        %v974 = vpack.c.b16 %v930, %v926
        %v975 = vpack.c.b16 %v931, %v927
        %v976 = vpack.c.b16 %v932, %v928
        %v977 = vpack.c.b16 %v933, %v929
        %v978 = vpack.c.b16 %v938, %v934
        %v979 = vpack.c.b16 %v939, %v935
        %v980 = vpack.c.b16 %v940, %v936
        %v981 = vpack.c.b16 %v941, %v937
        %v982 = vpack.c.b16 %v946, %v942
        %v983 = vpack.c.b16 %v947, %v943
        %v984 = vpack.c.b16 %v948, %v944
        %v985 = vpack.c.b16 %v949, %v945
        %v986 = vpack.c.b16 %v954, %v950
        %v987 = vpack.c.b16 %v955, %v951
        %v988 = vpack.c.b16 %v956, %v952
        %v989 = vpack.c.b16 %v957, %v953
        %1022 = vmatprep.subr.bf16.mxu0 %v959
        %1023 = vmatpush1.bf16.msra.mxu0 %v958
        %1024 = vmatprep.subr.bf16.mxu0 %v963
        %1025 = vmatpush1.bf16.msra.mxu0 %v962
        %1026 = vmatprep.subr.bf16.mxu0 %v967
        %1027 = vmatpush1.bf16.msra.mxu0 %v966
        %1028 = vmatprep.subr.bf16.mxu0 %v971
        %1029 = vmatpush1.bf16.msra.mxu0 %v970
        %1030 = vmatprep.subr.bf16.mxu0 %v975
        %1031 = vmatpush1.bf16.msra.mxu0 %v974
        %1032 = vmatprep.subr.bf16.mxu0 %v979
        %1033 = vmatpush1.bf16.msra.mxu0 %v978
        %1034 = vmatprep.subr.bf16.mxu0 %v983
        %1035 = vmatpush1.bf16.msra.mxu0 %v982
        %1036 = vmatprep.subr.bf16.mxu0 %v987
        %1037 = vmatpush1.bf16.msra.mxu0 %v986
        %1038 = vmatprep.subr.bf16.mxu0 0
        %1039 = vmatpush1.bf16.msra.mxu0 0
        %1040 = vmatprep.subr.bf16.mxu0 0
        %1041 = vmatpush1.bf16.msra.mxu0 0
        %1042 = vmatprep.subr.bf16.mxu0 0
        %1043 = vmatpush1.bf16.msra.mxu0 0
        %1044 = vmatprep.subr.bf16.mxu0 0
        %1045 = vmatpush1.bf16.msra.mxu0 0
        %1046 = vmatprep.subr.bf16.mxu0 0
        %1047 = vmatpush1.bf16.msra.mxu0 0
        %1048 = vmatprep.subr.bf16.mxu0 0
        %1049 = vmatpush1.bf16.msra.mxu0 0
        %1050 = vmatprep.subr.bf16.mxu0 0
        %1051 = vmatpush1.bf16.msra.mxu0 0
        %1052 = vmatprep.subr.bf16.mxu0 0
        %1053 = vmatpush1.bf16.msra.mxu0 0
        %1054 = vmatprep.mubr.bf16.mxu0 0
        %1055 = vmatmul.mubr.bf16.gmra.mrb[0].mxu0 %v792
        %v1056 = vpop.f32.mrb[0].mxu0
        %v1057 = vadd.f32 %v845, %v1056
        %v1058 = vpop.f32.mrb[0].mxu0
        %v1059 = vadd.f32 %v849, %v1058
        %v1060 = vpop.f32.mrb[0].mxu0
        %v1061 = vadd.f32 %v845, %v1060
        %v1062 = vpop.f32.mrb[0].mxu0
        %v1063 = vadd.f32 %v849, %v1062
        %1064 = vmatprep.mubr.bf16.mxu0 0
        %1065 = vmatmul.mubr.bf16.gmra.mrb[0].mxu0 %v793
        %v1066 = vpop.f32.mrb[0].mxu0
        %v1067 = vadd.f32 %v845, %v1066
        %v1068 = vpop.f32.mrb[0].mxu0
        %v1069 = vadd.f32 %v849, %v1068
        %v1070 = vpop.f32.mrb[0].mxu0
        %v1071 = vadd.f32 %v845, %v1070
        %v1072 = vpop.f32.mrb[0].mxu0
        %v1073 = vadd.f32 %v849, %v1072
        %1074 = vmatprep.mubr.bf16.mxu0 0
        %1075 = vmatmul.mubr.bf16.gmra.mrb[0].mxu0 %v794
        %v1076 = vpop.f32.mrb[0].mxu0
        %v1077 = vadd.f32 %v845, %v1076
        %v1078 = vpop.f32.mrb[0].mxu0
        %v1079 = vadd.f32 %v849, %v1078
        %v1080 = vpop.f32.mrb[0].mxu0
        %v1081 = vadd.f32 %v845, %v1080
        %v1082 = vpop.f32.mrb[0].mxu0
        %v1083 = vadd.f32 %v849, %v1082
        %1084 = vmatprep.mubr.bf16.mxu0 0
        %1085 = vmatmul.mubr.bf16.gmra.mrb[0].mxu0 %v795
        %v1086 = vpop.f32.mrb[0].mxu0
        %v1087 = vadd.f32 %v845, %v1086
        %v1088 = vpop.f32.mrb[0].mxu0
        %v1089 = vadd.f32 %v849, %v1088
        %v1090 = vpop.f32.mrb[0].mxu0
        %v1091 = vadd.f32 %v845, %v1090
        %v1092 = vpop.f32.mrb[0].mxu0
        %v1093 = vadd.f32 %v849, %v1092
        %1094 = vmatprep.mubr.bf16.mxu0 0
        %1095 = vmatmul.mubr.bf16.gmra.mrb[0].mxu0 %v796
        %v1096 = vpop.f32.mrb[0].mxu0
        %v1097 = vadd.f32 %v845, %v1096
        %v1098 = vpop.f32.mrb[0].mxu0
        %v1099 = vadd.f32 %v849, %v1098
        %v1100 = vpop.f32.mrb[0].mxu0
        %v1101 = vadd.f32 %v845, %v1100
        %v1102 = vpop.f32.mrb[0].mxu0
        %v1103 = vadd.f32 %v849, %v1102
        %1104 = vmatprep.mubr.bf16.mxu0 0
        %1105 = vmatmul.mubr.bf16.gmra.mrb[0].mxu0 %v797
        %v1106 = vpop.f32.mrb[0].mxu0
        %v1107 = vadd.f32 %v845, %v1106
        %v1108 = vpop.f32.mrb[0].mxu0
        %v1109 = vadd.f32 %v849, %v1108
        %v1110 = vpop.f32.mrb[0].mxu0
        %v1111 = vadd.f32 %v845, %v1110
        %v1112 = vpop.f32.mrb[0].mxu0
        %v1113 = vadd.f32 %v849, %v1112
        %1114 = vmatprep.mubr.bf16.mxu0 0
        %1115 = vmatmul.mubr.bf16.gmra.mrb[0].mxu0 %v798
        %v1116 = vpop.f32.mrb[0].mxu0
        %v1117 = vadd.f32 %v845, %v1116
        %v1118 = vpop.f32.mrb[0].mxu0
        %v1119 = vadd.f32 %v849, %v1118
        %v1120 = vpop.f32.mrb[0].mxu0
        %v1121 = vadd.f32 %v845, %v1120
        %v1122 = vpop.f32.mrb[0].mxu0
        %v1123 = vadd.f32 %v849, %v1122
        %1124 = vmatprep.mubr.bf16.mxu0 0
        %1125 = vmatmul.mubr.bf16.gmra.mrb[0].mxu0 %v799
        %v1126 = vpop.f32.mrb[0].mxu0
        %v1127 = vadd.f32 %v845, %v1126
        %v1128 = vpop.f32.mrb[0].mxu0
        %v1129 = vadd.f32 %v849, %v1128
        %v1130 = vpop.f32.mrb[0].mxu0
        %v1131 = vadd.f32 %v845, %v1130
        %v1132 = vpop.f32.mrb[0].mxu0
        %v1133 = vadd.f32 %v849, %v1132
        %1134 = vmatprep.mubr.bf16.mxu0 0
        %1135 = vmatmul.mubr.bf16.gmra.mrb[0].mxu0 %v800
        %v1136 = vpop.f32.mrb[0].mxu0
        %v1137 = vadd.f32 %v845, %v1136
        %v1138 = vpop.f32.mrb[0].mxu0
        %v1139 = vadd.f32 %v849, %v1138
        %v1140 = vpop.f32.mrb[0].mxu0
        %v1141 = vadd.f32 %v845, %v1140
        %v1142 = vpop.f32.mrb[0].mxu0
        %v1143 = vadd.f32 %v849, %v1142
        %1144 = vmatprep.mubr.bf16.mxu0 0
        %1145 = vmatmul.mubr.bf16.gmra.mrb[0].mxu0 %v801
        %v1146 = vpop.f32.mrb[0].mxu0
        %v1147 = vadd.f32 %v845, %v1146
        %v1148 = vpop.f32.mrb[0].mxu0
        %v1149 = vadd.f32 %v849, %v1148
        %v1150 = vpop.f32.mrb[0].mxu0
        %v1151 = vadd.f32 %v845, %v1150
        %v1152 = vpop.f32.mrb[0].mxu0
        %v1153 = vadd.f32 %v849, %v1152
        %1154 = vmatprep.mubr.bf16.mxu0 0
        %1155 = vmatmul.mubr.bf16.gmra.mrb[0].mxu0 %v802
        %v1156 = vpop.f32.mrb[0].mxu0
        %v1157 = vadd.f32 %v845, %v1156
        %v1158 = vpop.f32.mrb[0].mxu0
        %v1159 = vadd.f32 %v849, %v1158
        %v1160 = vpop.f32.mrb[0].mxu0
        %v1161 = vadd.f32 %v845, %v1160
        %v1162 = vpop.f32.mrb[0].mxu0
        %v1163 = vadd.f32 %v849, %v1162
        %1164 = vmatprep.mubr.bf16.mxu0 0
        %1165 = vmatmul.mubr.bf16.gmra.mrb[0].mxu0 %v803
        %v1166 = vpop.f32.mrb[0].mxu0
        %v1167 = vadd.f32 %v845, %v1166
        %v1168 = vpop.f32.mrb[0].mxu0
        %v1169 = vadd.f32 %v849, %v1168
        %v1170 = vpop.f32.mrb[0].mxu0
        %v1171 = vadd.f32 %v845, %v1170
        %v1172 = vpop.f32.mrb[0].mxu0
        %v1173 = vadd.f32 %v849, %v1172
        %1174 = vmatprep.mubr.bf16.mxu0 0
        %1175 = vmatmul.mubr.bf16.gmra.mrb[0].mxu0 %v804
        %v1176 = vpop.f32.mrb[0].mxu0
        %v1177 = vadd.f32 %v845, %v1176
        %v1178 = vpop.f32.mrb[0].mxu0
        %v1179 = vadd.f32 %v849, %v1178
        %v1180 = vpop.f32.mrb[0].mxu0
        %v1181 = vadd.f32 %v845, %v1180
        %v1182 = vpop.f32.mrb[0].mxu0
        %v1183 = vadd.f32 %v849, %v1182
        %1184 = vmatprep.mubr.bf16.mxu0 0
        %1185 = vmatmul.mubr.bf16.gmra.mrb[0].mxu0 %v805
        %v1186 = vpop.f32.mrb[0].mxu0
        %v1187 = vadd.f32 %v845, %v1186
        %v1188 = vpop.f32.mrb[0].mxu0
        %v1189 = vadd.f32 %v849, %v1188
        %v1190 = vpop.f32.mrb[0].mxu0
        %v1191 = vadd.f32 %v845, %v1190
        %v1192 = vpop.f32.mrb[0].mxu0
        %v1193 = vadd.f32 %v849, %v1192
        %1194 = vmatprep.mubr.bf16.mxu0 0
        %1195 = vmatmul.mubr.bf16.gmra.mrb[0].mxu0 %v806
        %v1196 = vpop.f32.mrb[0].mxu0
        %v1197 = vadd.f32 %v845, %v1196
        %v1198 = vpop.f32.mrb[0].mxu0
        %v1199 = vadd.f32 %v849, %v1198
        %v1200 = vpop.f32.mrb[0].mxu0
        %v1201 = vadd.f32 %v845, %v1200
        %v1202 = vpop.f32.mrb[0].mxu0
        %v1203 = vadd.f32 %v849, %v1202
        %1204 = vmatprep.mubr.bf16.mxu0 0
        %1205 = vmatmul.mubr.bf16.gmra.mrb[0].mxu0 %v807
        %v1206 = vpop.f32.mrb[0].mxu0
        %v1207 = vadd.f32 %v845, %v1206
        %v1208 = vpop.f32.mrb[0].mxu0
        %v1209 = vadd.f32 %v849, %v1208
        %v1210 = vpop.f32.mrb[0].mxu0
        %v1211 = vadd.f32 %v845, %v1210
        %v1212 = vpop.f32.mrb[0].mxu0
        %v1213 = vadd.f32 %v849, %v1212
        %1214 = vdwg.mxu0
        %1215 = vmatprep.subr.bf16.mxu0 %v961
        %1216 = vmatpush1.bf16.msra.mxu0 %v960
        %1217 = vmatprep.subr.bf16.mxu0 %v965
        %1218 = vmatpush1.bf16.msra.mxu0 %v964
        %1219 = vmatprep.subr.bf16.mxu0 %v969
        %1220 = vmatpush1.bf16.msra.mxu0 %v968
        %1221 = vmatprep.subr.bf16.mxu0 %v973
        %1222 = vmatpush1.bf16.msra.mxu0 %v972
        %1223 = vmatprep.subr.bf16.mxu0 %v977
        %1224 = vmatpush1.bf16.msra.mxu0 %v976
        %1225 = vmatprep.subr.bf16.mxu0 %v981
        %1226 = vmatpush1.bf16.msra.mxu0 %v980
        %1227 = vmatprep.subr.bf16.mxu0 %v985
        %1228 = vmatpush1.bf16.msra.mxu0 %v984
        %1229 = vmatprep.subr.bf16.mxu0 %v989
        %1230 = vmatpush1.bf16.msra.mxu0 %v988
        %1231 = vmatprep.subr.bf16.mxu0 0
        %1232 = vmatpush1.bf16.msra.mxu0 0
        %1233 = vmatprep.subr.bf16.mxu0 0
        %1234 = vmatpush1.bf16.msra.mxu0 0
        %1235 = vmatprep.subr.bf16.mxu0 0
        %1236 = vmatpush1.bf16.msra.mxu0 0
        %1237 = vmatprep.subr.bf16.mxu0 0
        %1238 = vmatpush1.bf16.msra.mxu0 0
        %1239 = vmatprep.subr.bf16.mxu0 0
        %1240 = vmatpush1.bf16.msra.mxu0 0
        %1241 = vmatprep.subr.bf16.mxu0 0
        %1242 = vmatpush1.bf16.msra.mxu0 0
        %1243 = vmatprep.subr.bf16.mxu0 0
        %1244 = vmatpush1.bf16.msra.mxu0 0
        %1245 = vmatprep.subr.bf16.mxu0 0
        %1246 = vmatpush1.bf16.msra.mxu0 0
        %1247 = vmatprep.mubr.bf16.mxu0 0
        %1248 = vmatmul.mubr.bf16.gmra.mrb[0].mxu0 %v792
        %v1249 = vpop.f32.mrb[0].mxu0
        %v1250 = vadd.f32 %v853, %v1249
        %v1251 = vpop.f32.mrb[0].mxu0
        %v1252 = vadd.f32 %v857, %v1251
        %v1253 = vpop.f32.mrb[0].mxu0
        %v1254 = vadd.f32 %v853, %v1253
        %v1255 = vpop.f32.mrb[0].mxu0
        %v1256 = vadd.f32 %v857, %v1255
        %1257 = vmatprep.mubr.bf16.mxu0 0
        %1258 = vmatmul.mubr.bf16.gmra.mrb[0].mxu0 %v793
        %v1259 = vpop.f32.mrb[0].mxu0
        %v1260 = vadd.f32 %v853, %v1259
        %v1261 = vpop.f32.mrb[0].mxu0
        %v1262 = vadd.f32 %v857, %v1261
        %v1263 = vpop.f32.mrb[0].mxu0
        %v1264 = vadd.f32 %v853, %v1263
        %v1265 = vpop.f32.mrb[0].mxu0
        %v1266 = vadd.f32 %v857, %v1265
        %1267 = vmatprep.mubr.bf16.mxu0 0
        %1268 = vmatmul.mubr.bf16.gmra.mrb[0].mxu0 %v794
        %v1269 = vpop.f32.mrb[0].mxu0
        %v1270 = vadd.f32 %v853, %v1269
        %v1271 = vpop.f32.mrb[0].mxu0
        %v1272 = vadd.f32 %v857, %v1271
        %v1273 = vpop.f32.mrb[0].mxu0
        %v1274 = vadd.f32 %v853, %v1273
        %v1275 = vpop.f32.mrb[0].mxu0
        %v1276 = vadd.f32 %v857, %v1275
        %1277 = vmatprep.mubr.bf16.mxu0 0
        %1278 = vmatmul.mubr.bf16.gmra.mrb[0].mxu0 %v795
        %v1279 = vpop.f32.mrb[0].mxu0
        %v1280 = vadd.f32 %v853, %v1279
        %v1281 = vpop.f32.mrb[0].mxu0
        %v1282 = vadd.f32 %v857, %v1281
        %v1283 = vpop.f32.mrb[0].mxu0
        %v1284 = vadd.f32 %v853, %v1283
        %v1285 = vpop.f32.mrb[0].mxu0
        %v1286 = vadd.f32 %v857, %v1285
        %1287 = vmatprep.mubr.bf16.mxu0 0
        %1288 = vmatmul.mubr.bf16.gmra.mrb[0].mxu0 %v796
        %v1289 = vpop.f32.mrb[0].mxu0
        %v1290 = vadd.f32 %v853, %v1289
        %v1291 = vpop.f32.mrb[0].mxu0
        %v1292 = vadd.f32 %v857, %v1291
        %v1293 = vpop.f32.mrb[0].mxu0
        %v1294 = vadd.f32 %v853, %v1293
        %v1295 = vpop.f32.mrb[0].mxu0
        %v1296 = vadd.f32 %v857, %v1295
        %1297 = vmatprep.mubr.bf16.mxu0 0
        %1298 = vmatmul.mubr.bf16.gmra.mrb[0].mxu0 %v797
        %v1299 = vpop.f32.mrb[0].mxu0
        %v1300 = vadd.f32 %v853, %v1299
        %v1301 = vpop.f32.mrb[0].mxu0
        %v1302 = vadd.f32 %v857, %v1301
        %v1303 = vpop.f32.mrb[0].mxu0
        %v1304 = vadd.f32 %v853, %v1303
        %v1305 = vpop.f32.mrb[0].mxu0
        %v1306 = vadd.f32 %v857, %v1305
        %1307 = vmatprep.mubr.bf16.mxu0 0
        %1308 = vmatmul.mubr.bf16.gmra.mrb[0].mxu0 %v798
        %v1309 = vpop.f32.mrb[0].mxu0
        %v1310 = vadd.f32 %v853, %v1309
        %v1311 = vpop.f32.mrb[0].mxu0
        %v1312 = vadd.f32 %v857, %v1311
        %v1313 = vpop.f32.mrb[0].mxu0
        %v1314 = vadd.f32 %v853, %v1313
        %v1315 = vpop.f32.mrb[0].mxu0
        %v1316 = vadd.f32 %v857, %v1315
        %1317 = vmatprep.mubr.bf16.mxu0 0
        %1318 = vmatmul.mubr.bf16.gmra.mrb[0].mxu0 %v799
        %v1319 = vpop.f32.mrb[0].mxu0
        %v1320 = vadd.f32 %v853, %v1319
        %v1321 = vpop.f32.mrb[0].mxu0
        %v1322 = vadd.f32 %v857, %v1321
        %v1323 = vpop.f32.mrb[0].mxu0
        %v1324 = vadd.f32 %v853, %v1323
        %v1325 = vpop.f32.mrb[0].mxu0
        %v1326 = vadd.f32 %v857, %v1325
        %1327 = vmatprep.mubr.bf16.mxu0 0
        %1328 = vmatmul.mubr.bf16.gmra.mrb[0].mxu0 %v800
        %v1329 = vpop.f32.mrb[0].mxu0
        %v1330 = vadd.f32 %v853, %v1329
        %v1331 = vpop.f32.mrb[0].mxu0
        %v1332 = vadd.f32 %v857, %v1331
        %v1333 = vpop.f32.mrb[0].mxu0
        %v1334 = vadd.f32 %v853, %v1333
        %v1335 = vpop.f32.mrb[0].mxu0
        %v1336 = vadd.f32 %v857, %v1335
        %1337 = vmatprep.mubr.bf16.mxu0 0
        %1338 = vmatmul.mubr.bf16.gmra.mrb[0].mxu0 %v801
        %v1339 = vpop.f32.mrb[0].mxu0
        %v1340 = vadd.f32 %v853, %v1339
        %v1341 = vpop.f32.mrb[0].mxu0
        %v1342 = vadd.f32 %v857, %v1341
        %v1343 = vpop.f32.mrb[0].mxu0
        %v1344 = vadd.f32 %v853, %v1343
        %v1345 = vpop.f32.mrb[0].mxu0
        %v1346 = vadd.f32 %v857, %v1345
        %1347 = vmatprep.mubr.bf16.mxu0 0
        %1348 = vmatmul.mubr.bf16.gmra.mrb[0].mxu0 %v802
        %v1349 = vpop.f32.mrb[0].mxu0
        %v1350 = vadd.f32 %v853, %v1349
        %v1351 = vpop.f32.mrb[0].mxu0
        %v1352 = vadd.f32 %v857, %v1351
        %v1353 = vpop.f32.mrb[0].mxu0
        %v1354 = vadd.f32 %v853, %v1353
        %v1355 = vpop.f32.mrb[0].mxu0
        %v1356 = vadd.f32 %v857, %v1355
        %1357 = vmatprep.mubr.bf16.mxu0 0
        %1358 = vmatmul.mubr.bf16.gmra.mrb[0].mxu0 %v803
        %v1359 = vpop.f32.mrb[0].mxu0
        %v1360 = vadd.f32 %v853, %v1359
        %v1361 = vpop.f32.mrb[0].mxu0
        %v1362 = vadd.f32 %v857, %v1361
        %v1363 = vpop.f32.mrb[0].mxu0
        %v1364 = vadd.f32 %v853, %v1363
        %v1365 = vpop.f32.mrb[0].mxu0
        %v1366 = vadd.f32 %v857, %v1365
        %1367 = vmatprep.mubr.bf16.mxu0 0
        %1368 = vmatmul.mubr.bf16.gmra.mrb[0].mxu0 %v804
        %v1369 = vpop.f32.mrb[0].mxu0
        %v1370 = vadd.f32 %v853, %v1369
        %v1371 = vpop.f32.mrb[0].mxu0
        %v1372 = vadd.f32 %v857, %v1371
        %v1373 = vpop.f32.mrb[0].mxu0
        %v1374 = vadd.f32 %v853, %v1373
        %v1375 = vpop.f32.mrb[0].mxu0
        %v1376 = vadd.f32 %v857, %v1375
        %1377 = vmatprep.mubr.bf16.mxu0 0
        %1378 = vmatmul.mubr.bf16.gmra.mrb[0].mxu0 %v805
        %v1379 = vpop.f32.mrb[0].mxu0
        %v1380 = vadd.f32 %v853, %v1379
        %v1381 = vpop.f32.mrb[0].mxu0
        %v1382 = vadd.f32 %v857, %v1381
        %v1383 = vpop.f32.mrb[0].mxu0
        %v1384 = vadd.f32 %v853, %v1383
        %v1385 = vpop.f32.mrb[0].mxu0
        %v1386 = vadd.f32 %v857, %v1385
        %1387 = vmatprep.mubr.bf16.mxu0 0
        %1388 = vmatmul.mubr.bf16.gmra.mrb[0].mxu0 %v806
        %v1389 = vpop.f32.mrb[0].mxu0
        %v1390 = vadd.f32 %v853, %v1389
        %v1391 = vpop.f32.mrb[0].mxu0
        %v1392 = vadd.f32 %v857, %v1391
        %v1393 = vpop.f32.mrb[0].mxu0
        %v1394 = vadd.f32 %v853, %v1393
        %v1395 = vpop.f32.mrb[0].mxu0
        %v1396 = vadd.f32 %v857, %v1395
        %1397 = vmatprep.mubr.bf16.mxu0 0
        %1398 = vmatmul.mubr.bf16.gmra.mrb[0].mxu0 %v807
        %v1399 = vpop.f32.mrb[0].mxu0
        %v1400 = vadd.f32 %v853, %v1399
        %v1401 = vpop.f32.mrb[0].mxu0
        %v1402 = vadd.f32 %v857, %v1401
        %v1403 = vpop.f32.mrb[0].mxu0
        %v1404 = vadd.f32 %v853, %v1403
        %v1405 = vpop.f32.mrb[0].mxu0
        %v1406 = vadd.f32 %v857, %v1405
        %1407 = vdwg.mxu0
        %v1408 = vmax.f32 %v1057, 0.0
        %v1409 = vmax.f32 %v1059, 0.0
        %v1410 = vmax.f32 %v1250, 0.0
        %v1411 = vmax.f32 %v1252, 0.0
        %v1412 = vmax.f32 %v1061, 0.0
        %v1413 = vmax.f32 %v1063, 0.0
        %v1414 = vmax.f32 %v1254, 0.0
        %v1415 = vmax.f32 %v1256, 0.0
        %v1416 = vmax.f32 %v1067, 0.0
        %v1417 = vmax.f32 %v1069, 0.0
        %v1418 = vmax.f32 %v1260, 0.0
        %v1419 = vmax.f32 %v1262, 0.0
        %v1420 = vmax.f32 %v1071, 0.0
        %v1421 = vmax.f32 %v1073, 0.0
        %v1422 = vmax.f32 %v1264, 0.0
        %v1423 = vmax.f32 %v1266, 0.0
        %v1424 = vmax.f32 %v1077, 0.0
        %v1425 = vmax.f32 %v1079, 0.0
        %v1426 = vmax.f32 %v1270, 0.0
        %v1427 = vmax.f32 %v1272, 0.0
        %v1428 = vmax.f32 %v1081, 0.0
        %v1429 = vmax.f32 %v1083, 0.0
        %v1430 = vmax.f32 %v1274, 0.0
        %v1431 = vmax.f32 %v1276, 0.0
        %v1432 = vmax.f32 %v1087, 0.0
        %v1433 = vmax.f32 %v1089, 0.0
        %v1434 = vmax.f32 %v1280, 0.0
        %v1435 = vmax.f32 %v1282, 0.0
        %v1436 = vmax.f32 %v1091, 0.0
        %v1437 = vmax.f32 %v1093, 0.0
        %v1438 = vmax.f32 %v1284, 0.0
        %v1439 = vmax.f32 %v1286, 0.0
        %v1440 = vmax.f32 %v1097, 0.0
        %v1441 = vmax.f32 %v1099, 0.0
        %v1442 = vmax.f32 %v1290, 0.0
        %v1443 = vmax.f32 %v1292, 0.0
        %v1444 = vmax.f32 %v1101, 0.0
        %v1445 = vmax.f32 %v1103, 0.0
        %v1446 = vmax.f32 %v1294, 0.0
        %v1447 = vmax.f32 %v1296, 0.0
        %v1448 = vmax.f32 %v1107, 0.0
        %v1449 = vmax.f32 %v1109, 0.0
        %v1450 = vmax.f32 %v1300, 0.0
        %v1451 = vmax.f32 %v1302, 0.0
        %v1452 = vmax.f32 %v1111, 0.0
        %v1453 = vmax.f32 %v1113, 0.0
        %v1454 = vmax.f32 %v1304, 0.0
        %v1455 = vmax.f32 %v1306, 0.0
        %v1456 = vmax.f32 %v1117, 0.0
        %v1457 = vmax.f32 %v1119, 0.0
        %v1458 = vmax.f32 %v1310, 0.0
        %v1459 = vmax.f32 %v1312, 0.0
        %v1460 = vmax.f32 %v1121, 0.0
        %v1461 = vmax.f32 %v1123, 0.0
        %v1462 = vmax.f32 %v1314, 0.0
        %v1463 = vmax.f32 %v1316, 0.0
        %v1464 = vmax.f32 %v1127, 0.0
        %v1465 = vmax.f32 %v1129, 0.0
        %v1466 = vmax.f32 %v1320, 0.0
        %v1467 = vmax.f32 %v1322, 0.0
        %v1468 = vmax.f32 %v1131, 0.0
        %v1469 = vmax.f32 %v1133, 0.0
        %v1470 = vmax.f32 %v1324, 0.0
        %v1471 = vmax.f32 %v1326, 0.0
        %v1472 = vmax.f32 %v1137, 0.0
        %v1473 = vmax.f32 %v1139, 0.0
        %v1474 = vmax.f32 %v1330, 0.0
        %v1475 = vmax.f32 %v1332, 0.0
        %v1476 = vmax.f32 %v1141, 0.0
        %v1477 = vmax.f32 %v1143, 0.0
        %v1478 = vmax.f32 %v1334, 0.0
        %v1479 = vmax.f32 %v1336, 0.0
        %v1480 = vmax.f32 %v1147, 0.0
        %v1481 = vmax.f32 %v1149, 0.0
        %v1482 = vmax.f32 %v1340, 0.0
        %v1483 = vmax.f32 %v1342, 0.0
        %v1484 = vmax.f32 %v1151, 0.0
        %v1485 = vmax.f32 %v1153, 0.0
        %v1486 = vmax.f32 %v1344, 0.0
        %v1487 = vmax.f32 %v1346, 0.0
        %v1488 = vmax.f32 %v1157, 0.0
        %v1489 = vmax.f32 %v1159, 0.0
        %v1490 = vmax.f32 %v1350, 0.0
        %v1491 = vmax.f32 %v1352, 0.0
        %v1492 = vmax.f32 %v1161, 0.0
        %v1493 = vmax.f32 %v1163, 0.0
        %v1494 = vmax.f32 %v1354, 0.0
        %v1495 = vmax.f32 %v1356, 0.0
        %v1496 = vmax.f32 %v1167, 0.0
        %v1497 = vmax.f32 %v1169, 0.0
        %v1498 = vmax.f32 %v1360, 0.0
        %v1499 = vmax.f32 %v1362, 0.0
        %v1500 = vmax.f32 %v1171, 0.0
        %v1501 = vmax.f32 %v1173, 0.0
        %v1502 = vmax.f32 %v1364, 0.0
        %v1503 = vmax.f32 %v1366, 0.0
        %v1504 = vmax.f32 %v1177, 0.0
        %v1505 = vmax.f32 %v1179, 0.0
        %v1506 = vmax.f32 %v1370, 0.0
        %v1507 = vmax.f32 %v1372, 0.0
        %v1508 = vmax.f32 %v1181, 0.0
        %v1509 = vmax.f32 %v1183, 0.0
        %v1510 = vmax.f32 %v1374, 0.0
        %v1511 = vmax.f32 %v1376, 0.0
        %v1512 = vmax.f32 %v1187, 0.0
        %v1513 = vmax.f32 %v1189, 0.0
        %v1514 = vmax.f32 %v1380, 0.0
        %v1515 = vmax.f32 %v1382, 0.0
        %v1516 = vmax.f32 %v1191, 0.0
        %v1517 = vmax.f32 %v1193, 0.0
        %v1518 = vmax.f32 %v1384, 0.0
        %v1519 = vmax.f32 %v1386, 0.0
        %v1520 = vmax.f32 %v1197, 0.0
        %v1521 = vmax.f32 %v1199, 0.0
        %v1522 = vmax.f32 %v1390, 0.0
        %v1523 = vmax.f32 %v1392, 0.0
        %v1524 = vmax.f32 %v1201, 0.0
        %v1525 = vmax.f32 %v1203, 0.0
        %v1526 = vmax.f32 %v1394, 0.0
        %v1527 = vmax.f32 %v1396, 0.0
        %v1528 = vmax.f32 %v1207, 0.0
        %v1529 = vmax.f32 %v1209, 0.0
        %v1530 = vmax.f32 %v1400, 0.0
        %v1531 = vmax.f32 %v1402, 0.0
        %v1532 = vmax.f32 %v1211, 0.0
        %v1533 = vmax.f32 %v1213, 0.0
        %v1534 = vmax.f32 %v1404, 0.0
        %v1535 = vmax.f32 %v1406, 0.0
        %v1536 = vpack.c.bf16 %v1412, %v1408
        %v1537 = vpack.c.bf16 %v1413, %v1409
        %v1538 = vpack.c.bf16 %v1414, %v1410
        %v1539 = vpack.c.bf16 %v1415, %v1411
        %v1540 = vpack.c.bf16 %v1420, %v1416
        %v1541 = vpack.c.bf16 %v1421, %v1417
        %v1542 = vpack.c.bf16 %v1422, %v1418
        %v1543 = vpack.c.bf16 %v1423, %v1419
        %v1544 = vpack.c.bf16 %v1428, %v1424
        %v1545 = vpack.c.bf16 %v1429, %v1425
        %v1546 = vpack.c.bf16 %v1430, %v1426
        %v1547 = vpack.c.bf16 %v1431, %v1427
        %v1548 = vpack.c.bf16 %v1436, %v1432
        %v1549 = vpack.c.bf16 %v1437, %v1433
        %v1550 = vpack.c.bf16 %v1438, %v1434
        %v1551 = vpack.c.bf16 %v1439, %v1435
        %v1552 = vpack.c.bf16 %v1444, %v1440
        %v1553 = vpack.c.bf16 %v1445, %v1441
        %v1554 = vpack.c.bf16 %v1446, %v1442
        %v1555 = vpack.c.bf16 %v1447, %v1443
        %v1556 = vpack.c.bf16 %v1452, %v1448
        %v1557 = vpack.c.bf16 %v1453, %v1449
        %v1558 = vpack.c.bf16 %v1454, %v1450
        %v1559 = vpack.c.bf16 %v1455, %v1451
        %v1560 = vpack.c.bf16 %v1460, %v1456
        %v1561 = vpack.c.bf16 %v1461, %v1457
        %v1562 = vpack.c.bf16 %v1462, %v1458
        %v1563 = vpack.c.bf16 %v1463, %v1459
        %v1564 = vpack.c.bf16 %v1468, %v1464
        %v1565 = vpack.c.bf16 %v1469, %v1465
        %v1566 = vpack.c.bf16 %v1470, %v1466
        %v1567 = vpack.c.bf16 %v1471, %v1467
        %v1568 = vpack.c.bf16 %v1476, %v1472
        %v1569 = vpack.c.bf16 %v1477, %v1473
        %v1570 = vpack.c.bf16 %v1478, %v1474
        %v1571 = vpack.c.bf16 %v1479, %v1475
        %v1572 = vpack.c.bf16 %v1484, %v1480
        %v1573 = vpack.c.bf16 %v1485, %v1481
        %v1574 = vpack.c.bf16 %v1486, %v1482
        %v1575 = vpack.c.bf16 %v1487, %v1483
        %v1576 = vpack.c.bf16 %v1492, %v1488
        %v1577 = vpack.c.bf16 %v1493, %v1489
        %v1578 = vpack.c.bf16 %v1494, %v1490
        %v1579 = vpack.c.bf16 %v1495, %v1491
        %v1580 = vpack.c.bf16 %v1500, %v1496
        %v1581 = vpack.c.bf16 %v1501, %v1497
        %v1582 = vpack.c.bf16 %v1502, %v1498
        %v1583 = vpack.c.bf16 %v1503, %v1499
        %v1584 = vpack.c.bf16 %v1508, %v1504
        %v1585 = vpack.c.bf16 %v1509, %v1505
        %v1586 = vpack.c.bf16 %v1510, %v1506
        %v1587 = vpack.c.bf16 %v1511, %v1507
        %v1588 = vpack.c.bf16 %v1516, %v1512
        %v1589 = vpack.c.bf16 %v1517, %v1513
        %v1590 = vpack.c.bf16 %v1518, %v1514
        %v1591 = vpack.c.bf16 %v1519, %v1515
        %v1592 = vpack.c.bf16 %v1524, %v1520
        %v1593 = vpack.c.bf16 %v1525, %v1521
        %v1594 = vpack.c.bf16 %v1526, %v1522
        %v1595 = vpack.c.bf16 %v1527, %v1523
        %v1596 = vpack.c.bf16 %v1532, %v1528
        %v1597 = vpack.c.bf16 %v1533, %v1529
        %v1598 = vpack.c.bf16 %v1534, %v1530
        %v1599 = vpack.c.bf16 %v1535, %v1531
        %v1600 = vld [vmem:[#allocation7] sm:$0xf]
        %v1601 = vld [vmem:[#allocation7 + $0x4] sm:$0xf]
        %v1602 = vld [vmem:[#allocation7 + $0x8] sm:$0xf]
        %v1603 = vld [vmem:[#allocation7 + $0xc] sm:$0xf]
        %v1604 = vld [vmem:[#allocation7 + $0x10] sm:$0xf]
        %v1605 = vld [vmem:[#allocation7 + $0x14] sm:$0xf]
        %v1606 = vld [vmem:[#allocation7 + $0x18] sm:$0xf]
        %v1607 = vld [vmem:[#allocation7 + $0x1c] sm:$0xf]
        %v1608 = vld [vmem:[#allocation7 + $0x20] sm:$0xf]
        %v1609 = vld [vmem:[#allocation7 + $0x24] sm:$0xf]
        %v1610 = vld [vmem:[#allocation7 + $0x28] sm:$0xf]
        %v1611 = vld [vmem:[#allocation7 + $0x2c] sm:$0xf]
        %v1612 = vld [vmem:[#allocation7 + $0x30] sm:$0xf]
        %v1613 = vld [vmem:[#allocation7 + $0x34] sm:$0xf]
        %v1614 = vld [vmem:[#allocation7 + $0x38] sm:$0xf]
        %v1615 = vld [vmem:[#allocation7 + $0x3c] sm:$0xf]
        %v1616 = vld [vmem:[#allocation7 + $0x40] sm:$0xf]
        %v1617 = vld [vmem:[#allocation7 + $0x44] sm:$0xf]
        %v1618 = vld [vmem:[#allocation7 + $0x48] sm:$0xf]
        %v1619 = vld [vmem:[#allocation7 + $0x4c] sm:$0xf]
        %v1620 = vld [vmem:[#allocation7 + $0x50] sm:$0xf]
        %v1621 = vld [vmem:[#allocation7 + $0x54] sm:$0xf]
        %v1622 = vld [vmem:[#allocation7 + $0x58] sm:$0xf]
        %v1623 = vld [vmem:[#allocation7 + $0x5c] sm:$0xf]
        %v1624 = vld [vmem:[#allocation7 + $0x60] sm:$0xf]
        %v1625 = vld [vmem:[#allocation7 + $0x64] sm:$0xf]
        %v1626 = vld [vmem:[#allocation7 + $0x68] sm:$0xf]
        %v1627 = vld [vmem:[#allocation7 + $0x6c] sm:$0xf]
        %v1628 = vld [vmem:[#allocation7 + $0x70] sm:$0xf]
        %v1629 = vld [vmem:[#allocation7 + $0x74] sm:$0xf]
        %v1630 = vld [vmem:[#allocation7 + $0x78] sm:$0xf]
        %v1631 = vld [vmem:[#allocation7 + $0x7c] sm:$0xf]
        %v1632 = vld [vmem:[#allocation7 + $0x80] sm:$0xf]
        %v1633 = vld [vmem:[#allocation7 + $0x84] sm:$0xf]
        %v1634 = vld [vmem:[#allocation7 + $0x88] sm:$0xf]
        %v1635 = vld [vmem:[#allocation7 + $0x8c] sm:$0xf]
        %v1636 = vld [vmem:[#allocation7 + $0x90] sm:$0xf]
        %v1637 = vld [vmem:[#allocation7 + $0x94] sm:$0xf]
        %v1638 = vld [vmem:[#allocation7 + $0x98] sm:$0xf]
        %v1639 = vld [vmem:[#allocation7 + $0x9c] sm:$0xf]
        %v1640 = vld [vmem:[#allocation7 + $0xa0] sm:$0xf]
        %v1641 = vld [vmem:[#allocation7 + $0xa4] sm:$0xf]
        %v1642 = vld [vmem:[#allocation7 + $0xa8] sm:$0xf]
        %v1643 = vld [vmem:[#allocation7 + $0xac] sm:$0xf]
        %v1644 = vld [vmem:[#allocation7 + $0xb0] sm:$0xf]
        %v1645 = vld [vmem:[#allocation7 + $0xb4] sm:$0xf]
        %v1646 = vld [vmem:[#allocation7 + $0xb8] sm:$0xf]
        %v1647 = vld [vmem:[#allocation7 + $0xbc] sm:$0xf]
        %v1648 = vld [vmem:[#allocation7 + $0xc0] sm:$0xf]
        %v1649 = vld [vmem:[#allocation7 + $0xc4] sm:$0xf]
        %v1650 = vld [vmem:[#allocation7 + $0xc8] sm:$0xf]
        %v1651 = vld [vmem:[#allocation7 + $0xcc] sm:$0xf]
        %v1652 = vld [vmem:[#allocation7 + $0xd0] sm:$0xf]
        %v1653 = vld [vmem:[#allocation7 + $0xd4] sm:$0xf]
        %v1654 = vld [vmem:[#allocation7 + $0xd8] sm:$0xf]
        %v1655 = vld [vmem:[#allocation7 + $0xdc] sm:$0xf]
        %v1656 = vld [vmem:[#allocation7 + $0xe0] sm:$0xf]
        %v1657 = vld [vmem:[#allocation7 + $0xe4] sm:$0xf]
        %v1658 = vld [vmem:[#allocation7 + $0xe8] sm:$0xf]
        %v1659 = vld [vmem:[#allocation7 + $0xec] sm:$0xf]
        %v1660 = vld [vmem:[#allocation7 + $0xf0] sm:$0xf]
        %v1661 = vld [vmem:[#allocation7 + $0xf4] sm:$0xf]
        %v1662 = vld [vmem:[#allocation7 + $0xf8] sm:$0xf]
        %v1663 = vld [vmem:[#allocation7 + $0xfc] sm:$0xf]
        %v1664 = vld [vmem:[%s6] sm:$0x1]
        %v1666 = vlaneseq
        %v1667 = vshrl.u32 %v1666, 7
        %v1668 = vsub.s32 0, %v1667
        %v1669 = vrot.slane %v1664, %v1668
        %v1735 = vunpack.c.l.b16 %v1600
        %v1736 = vunpack.c.l.b16 %v1601
        %v1737 = vunpack.c.l.b16 %v1602
        %v1738 = vunpack.c.l.b16 %v1603
        %v1739 = vunpack.c.l.b16 %v1604
        %v1740 = vunpack.c.l.b16 %v1605
        %v1741 = vunpack.c.l.b16 %v1606
        %v1742 = vunpack.c.l.b16 %v1607
        %v1743 = vunpack.c.l.b16 %v1608
        %v1744 = vunpack.c.l.b16 %v1609
        %v1745 = vunpack.c.l.b16 %v1610
        %v1746 = vunpack.c.l.b16 %v1611
        %v1747 = vunpack.c.l.b16 %v1612
        %v1748 = vunpack.c.l.b16 %v1613
        %v1749 = vunpack.c.l.b16 %v1614
        %v1750 = vunpack.c.l.b16 %v1615
        %v1751 = vunpack.c.l.b16 %v1616
        %v1752 = vunpack.c.l.b16 %v1617
        %v1753 = vunpack.c.l.b16 %v1618
        %v1754 = vunpack.c.l.b16 %v1619
        %v1755 = vunpack.c.l.b16 %v1620
        %v1756 = vunpack.c.l.b16 %v1621
        %v1757 = vunpack.c.l.b16 %v1622
        %v1758 = vunpack.c.l.b16 %v1623
        %v1759 = vunpack.c.l.b16 %v1624
        %v1760 = vunpack.c.l.b16 %v1625
        %v1761 = vunpack.c.l.b16 %v1626
        %v1762 = vunpack.c.l.b16 %v1627
        %v1763 = vunpack.c.l.b16 %v1628
        %v1764 = vunpack.c.l.b16 %v1629
        %v1765 = vunpack.c.l.b16 %v1630
        %v1766 = vunpack.c.l.b16 %v1631
        %v1767 = vunpack.c.l.b16 %v1632
        %v1768 = vunpack.c.l.b16 %v1633
        %v1769 = vunpack.c.l.b16 %v1634
        %v1770 = vunpack.c.l.b16 %v1635
        %v1771 = vunpack.c.l.b16 %v1636
        %v1772 = vunpack.c.l.b16 %v1637
        %v1773 = vunpack.c.l.b16 %v1638
        %v1774 = vunpack.c.l.b16 %v1639
        %v1775 = vunpack.c.l.b16 %v1640
        %v1776 = vunpack.c.l.b16 %v1641
        %v1777 = vunpack.c.l.b16 %v1642
        %v1778 = vunpack.c.l.b16 %v1643
        %v1779 = vunpack.c.l.b16 %v1644
        %v1780 = vunpack.c.l.b16 %v1645
        %v1781 = vunpack.c.l.b16 %v1646
        %v1782 = vunpack.c.l.b16 %v1647
        %v1783 = vunpack.c.l.b16 %v1648
        %v1784 = vunpack.c.l.b16 %v1649
        %v1785 = vunpack.c.l.b16 %v1650
        %v1786 = vunpack.c.l.b16 %v1651
        %v1787 = vunpack.c.l.b16 %v1652
        %v1788 = vunpack.c.l.b16 %v1653
        %v1789 = vunpack.c.l.b16 %v1654
        %v1790 = vunpack.c.l.b16 %v1655
        %v1791 = vunpack.c.l.b16 %v1656
        %v1792 = vunpack.c.l.b16 %v1657
        %v1793 = vunpack.c.l.b16 %v1658
        %v1794 = vunpack.c.l.b16 %v1659
        %v1795 = vunpack.c.l.b16 %v1660
        %v1796 = vunpack.c.l.b16 %v1661
        %v1797 = vunpack.c.l.b16 %v1662
        %v1798 = vunpack.c.l.b16 %v1663
        %v1799 = vpack.c.b16 %v1736, %v1735
        %v1800 = vpack.c.b16 %v1738, %v1737
        %v1801 = vpack.c.b16 %v1740, %v1739
        %v1802 = vpack.c.b16 %v1742, %v1741
        %v1803 = vpack.c.b16 %v1744, %v1743
        %v1804 = vpack.c.b16 %v1746, %v1745
        %v1805 = vpack.c.b16 %v1748, %v1747
        %v1806 = vpack.c.b16 %v1750, %v1749
        %v1807 = vpack.c.b16 %v1752, %v1751
        %v1808 = vpack.c.b16 %v1754, %v1753
        %v1809 = vpack.c.b16 %v1756, %v1755
        %v1810 = vpack.c.b16 %v1758, %v1757
        %v1811 = vpack.c.b16 %v1760, %v1759
        %v1812 = vpack.c.b16 %v1762, %v1761
        %v1813 = vpack.c.b16 %v1764, %v1763
        %v1814 = vpack.c.b16 %v1766, %v1765
        %v1815 = vpack.c.b16 %v1768, %v1767
        %v1816 = vpack.c.b16 %v1770, %v1769
        %v1817 = vpack.c.b16 %v1772, %v1771
        %v1818 = vpack.c.b16 %v1774, %v1773
        %v1819 = vpack.c.b16 %v1776, %v1775
        %v1820 = vpack.c.b16 %v1778, %v1777
        %v1821 = vpack.c.b16 %v1780, %v1779
        %v1822 = vpack.c.b16 %v1782, %v1781
        %v1823 = vpack.c.b16 %v1784, %v1783
        %v1824 = vpack.c.b16 %v1786, %v1785
        %v1825 = vpack.c.b16 %v1788, %v1787
        %v1826 = vpack.c.b16 %v1790, %v1789
        %v1827 = vpack.c.b16 %v1792, %v1791
        %v1828 = vpack.c.b16 %v1794, %v1793
        %v1829 = vpack.c.b16 %v1796, %v1795
        %v1830 = vpack.c.b16 %v1798, %v1797
        %1863 = vmatprep.subr.bf16.mxu0 0
        %1864 = vmatpush1.bf16.msra.mxu0 %v1799
        %1865 = vmatprep.subr.bf16.mxu0 0
        %1866 = vmatpush1.bf16.msra.mxu0 %v1800
        %1867 = vmatprep.subr.bf16.mxu0 0
        %1868 = vmatpush1.bf16.msra.mxu0 %v1801
        %1869 = vmatprep.subr.bf16.mxu0 0
        %1870 = vmatpush1.bf16.msra.mxu0 %v1802
        %1871 = vmatprep.subr.bf16.mxu0 0
        %1872 = vmatpush1.bf16.msra.mxu0 %v1803
        %1873 = vmatprep.subr.bf16.mxu0 0
        %1874 = vmatpush1.bf16.msra.mxu0 %v1804
        %1875 = vmatprep.subr.bf16.mxu0 0
        %1876 = vmatpush1.bf16.msra.mxu0 %v1805
        %1877 = vmatprep.subr.bf16.mxu0 0
        %1878 = vmatpush1.bf16.msra.mxu0 %v1806
        %1879 = vmatprep.subr.bf16.mxu0 0
        %1880 = vmatpush1.bf16.msra.mxu0 %v1807
        %1881 = vmatprep.subr.bf16.mxu0 0
        %1882 = vmatpush1.bf16.msra.mxu0 %v1808
        %1883 = vmatprep.subr.bf16.mxu0 0
        %1884 = vmatpush1.bf16.msra.mxu0 %v1809
        %1885 = vmatprep.subr.bf16.mxu0 0
        %1886 = vmatpush1.bf16.msra.mxu0 %v1810
        %1887 = vmatprep.subr.bf16.mxu0 0
        %1888 = vmatpush1.bf16.msra.mxu0 %v1811
        %1889 = vmatprep.subr.bf16.mxu0 0
        %1890 = vmatpush1.bf16.msra.mxu0 %v1812
        %1891 = vmatprep.subr.bf16.mxu0 0
        %1892 = vmatpush1.bf16.msra.mxu0 %v1813
        %1893 = vmatprep.subr.bf16.mxu0 0
        %1894 = vmatpush1.bf16.msra.mxu0 %v1814
        %1895 = vmatprep.mubr.bf16.mxu0 %v1537
        %1896 = vmatmul.mubr.bf16.gmra.mrb[0].mxu0 %v1536
        %v1897 = vpop.f32.mrb[0].mxu0
        %v1898 = vadd.f32 %v1669, %v1897
        %v1899 = vpop.f32.mrb[0].mxu0
        %v1900 = vpop.f32.mrb[0].mxu0
        %v1901 = vadd.f32 %v1669, %v1900
        %v1902 = vpop.f32.mrb[0].mxu0
        %1903 = vmatprep.mubr.bf16.mxu0 %v1541
        %1904 = vmatmul.mubr.bf16.gmra.mrb[0].mxu0 %v1540
        %v1905 = vpop.f32.mrb[0].mxu0
        %v1906 = vadd.f32 %v1669, %v1905
        %v1907 = vpop.f32.mrb[0].mxu0
        %v1908 = vpop.f32.mrb[0].mxu0
        %v1909 = vadd.f32 %v1669, %v1908
        %v1910 = vpop.f32.mrb[0].mxu0
        %1911 = vmatprep.mubr.bf16.mxu0 %v1545
        %1912 = vmatmul.mubr.bf16.gmra.mrb[0].mxu0 %v1544
        %v1913 = vpop.f32.mrb[0].mxu0
        %v1914 = vadd.f32 %v1669, %v1913
        %v1915 = vpop.f32.mrb[0].mxu0
        %v1916 = vpop.f32.mrb[0].mxu0
        %v1917 = vadd.f32 %v1669, %v1916
        %v1918 = vpop.f32.mrb[0].mxu0
        %1919 = vmatprep.mubr.bf16.mxu0 %v1549
        %1920 = vmatmul.mubr.bf16.gmra.mrb[0].mxu0 %v1548
        %v1921 = vpop.f32.mrb[0].mxu0
        %v1922 = vadd.f32 %v1669, %v1921
        %v1923 = vpop.f32.mrb[0].mxu0
        %v1924 = vpop.f32.mrb[0].mxu0
        %v1925 = vadd.f32 %v1669, %v1924
        %v1926 = vpop.f32.mrb[0].mxu0
        %1927 = vmatprep.mubr.bf16.mxu0 %v1553
        %1928 = vmatmul.mubr.bf16.gmra.mrb[0].mxu0 %v1552
        %v1929 = vpop.f32.mrb[0].mxu0
        %v1930 = vadd.f32 %v1669, %v1929
        %v1931 = vpop.f32.mrb[0].mxu0
        %v1932 = vpop.f32.mrb[0].mxu0
        %v1933 = vadd.f32 %v1669, %v1932
        %v1934 = vpop.f32.mrb[0].mxu0
        %1935 = vmatprep.mubr.bf16.mxu0 %v1557
        %1936 = vmatmul.mubr.bf16.gmra.mrb[0].mxu0 %v1556
        %v1937 = vpop.f32.mrb[0].mxu0
        %v1938 = vadd.f32 %v1669, %v1937
        %v1939 = vpop.f32.mrb[0].mxu0
        %v1940 = vpop.f32.mrb[0].mxu0
        %v1941 = vadd.f32 %v1669, %v1940
        %v1942 = vpop.f32.mrb[0].mxu0
        %1943 = vmatprep.mubr.bf16.mxu0 %v1561
        %1944 = vmatmul.mubr.bf16.gmra.mrb[0].mxu0 %v1560
        %v1945 = vpop.f32.mrb[0].mxu0
        %v1946 = vadd.f32 %v1669, %v1945
        %v1947 = vpop.f32.mrb[0].mxu0
        %v1948 = vpop.f32.mrb[0].mxu0
        %v1949 = vadd.f32 %v1669, %v1948
        %v1950 = vpop.f32.mrb[0].mxu0
        %1951 = vmatprep.mubr.bf16.mxu0 %v1565
        %1952 = vmatmul.mubr.bf16.gmra.mrb[0].mxu0 %v1564
        %v1953 = vpop.f32.mrb[0].mxu0
        %v1954 = vadd.f32 %v1669, %v1953
        %v1955 = vpop.f32.mrb[0].mxu0
        %v1956 = vpop.f32.mrb[0].mxu0
        %v1957 = vadd.f32 %v1669, %v1956
        %v1958 = vpop.f32.mrb[0].mxu0
        %1959 = vmatprep.mubr.bf16.mxu0 %v1569
        %1960 = vmatmul.mubr.bf16.gmra.mrb[0].mxu0 %v1568
        %v1961 = vpop.f32.mrb[0].mxu0
        %v1962 = vadd.f32 %v1669, %v1961
        %v1963 = vpop.f32.mrb[0].mxu0
        %v1964 = vpop.f32.mrb[0].mxu0
        %v1965 = vadd.f32 %v1669, %v1964
        %v1966 = vpop.f32.mrb[0].mxu0
        %1967 = vmatprep.mubr.bf16.mxu0 %v1573
        %1968 = vmatmul.mubr.bf16.gmra.mrb[0].mxu0 %v1572
        %v1969 = vpop.f32.mrb[0].mxu0
        %v1970 = vadd.f32 %v1669, %v1969
        %v1971 = vpop.f32.mrb[0].mxu0
        %v1972 = vpop.f32.mrb[0].mxu0
        %v1973 = vadd.f32 %v1669, %v1972
        %v1974 = vpop.f32.mrb[0].mxu0
        %1975 = vmatprep.mubr.bf16.mxu0 %v1577
        %1976 = vmatmul.mubr.bf16.gmra.mrb[0].mxu0 %v1576
        %v1977 = vpop.f32.mrb[0].mxu0
        %v1978 = vadd.f32 %v1669, %v1977
        %v1979 = vpop.f32.mrb[0].mxu0
        %v1980 = vpop.f32.mrb[0].mxu0
        %v1981 = vadd.f32 %v1669, %v1980
        %v1982 = vpop.f32.mrb[0].mxu0
        %1983 = vmatprep.mubr.bf16.mxu0 %v1581
        %1984 = vmatmul.mubr.bf16.gmra.mrb[0].mxu0 %v1580
        %v1985 = vpop.f32.mrb[0].mxu0
        %v1986 = vadd.f32 %v1669, %v1985
        %v1987 = vpop.f32.mrb[0].mxu0
        %v1988 = vpop.f32.mrb[0].mxu0
        %v1989 = vadd.f32 %v1669, %v1988
        %v1990 = vpop.f32.mrb[0].mxu0
        %1991 = vmatprep.mubr.bf16.mxu0 %v1585
        %1992 = vmatmul.mubr.bf16.gmra.mrb[0].mxu0 %v1584
        %v1993 = vpop.f32.mrb[0].mxu0
        %v1994 = vadd.f32 %v1669, %v1993
        %v1995 = vpop.f32.mrb[0].mxu0
        %v1996 = vpop.f32.mrb[0].mxu0
        %v1997 = vadd.f32 %v1669, %v1996
        %v1998 = vpop.f32.mrb[0].mxu0
        %1999 = vmatprep.mubr.bf16.mxu0 %v1589
        %2000 = vmatmul.mubr.bf16.gmra.mrb[0].mxu0 %v1588
        %v2001 = vpop.f32.mrb[0].mxu0
        %v2002 = vadd.f32 %v1669, %v2001
        %v2003 = vpop.f32.mrb[0].mxu0
        %v2004 = vpop.f32.mrb[0].mxu0
        %v2005 = vadd.f32 %v1669, %v2004
        %v2006 = vpop.f32.mrb[0].mxu0
        %2007 = vmatprep.mubr.bf16.mxu0 %v1593
        %2008 = vmatmul.mubr.bf16.gmra.mrb[0].mxu0 %v1592
        %v2009 = vpop.f32.mrb[0].mxu0
        %v2010 = vadd.f32 %v1669, %v2009
        %v2011 = vpop.f32.mrb[0].mxu0
        %v2012 = vpop.f32.mrb[0].mxu0
        %v2013 = vadd.f32 %v1669, %v2012
        %v2014 = vpop.f32.mrb[0].mxu0
        %2015 = vmatprep.mubr.bf16.mxu0 %v1597
        %2016 = vmatmul.mubr.bf16.gmra.mrb[0].mxu0 %v1596
        %v2017 = vpop.f32.mrb[0].mxu0
        %v2018 = vadd.f32 %v1669, %v2017
        %v2019 = vpop.f32.mrb[0].mxu0
        %v2020 = vpop.f32.mrb[0].mxu0
        %v2021 = vadd.f32 %v1669, %v2020
        %v2022 = vpop.f32.mrb[0].mxu0
        %2023 = vdwg.mxu0
        %2024 = vmatprep.subr.bf16.mxu0 0
        %2025 = vmatpush1.bf16.msra.mxu0 %v1815
        %2026 = vmatprep.subr.bf16.mxu0 0
        %2027 = vmatpush1.bf16.msra.mxu0 %v1816
        %2028 = vmatprep.subr.bf16.mxu0 0
        %2029 = vmatpush1.bf16.msra.mxu0 %v1817
        %2030 = vmatprep.subr.bf16.mxu0 0
        %2031 = vmatpush1.bf16.msra.mxu0 %v1818
        %2032 = vmatprep.subr.bf16.mxu0 0
        %2033 = vmatpush1.bf16.msra.mxu0 %v1819
        %2034 = vmatprep.subr.bf16.mxu0 0
        %2035 = vmatpush1.bf16.msra.mxu0 %v1820
        %2036 = vmatprep.subr.bf16.mxu0 0
        %2037 = vmatpush1.bf16.msra.mxu0 %v1821
        %2038 = vmatprep.subr.bf16.mxu0 0
        %2039 = vmatpush1.bf16.msra.mxu0 %v1822
        %2040 = vmatprep.subr.bf16.mxu0 0
        %2041 = vmatpush1.bf16.msra.mxu0 %v1823
        %2042 = vmatprep.subr.bf16.mxu0 0
        %2043 = vmatpush1.bf16.msra.mxu0 %v1824
        %2044 = vmatprep.subr.bf16.mxu0 0
        %2045 = vmatpush1.bf16.msra.mxu0 %v1825
        %2046 = vmatprep.subr.bf16.mxu0 0
        %2047 = vmatpush1.bf16.msra.mxu0 %v1826
        %2048 = vmatprep.subr.bf16.mxu0 0
        %2049 = vmatpush1.bf16.msra.mxu0 %v1827
        %2050 = vmatprep.subr.bf16.mxu0 0
        %2051 = vmatpush1.bf16.msra.mxu0 %v1828
        %2052 = vmatprep.subr.bf16.mxu0 0
        %2053 = vmatpush1.bf16.msra.mxu0 %v1829
        %2054 = vmatprep.subr.bf16.mxu0 0
        %2055 = vmatpush1.bf16.msra.mxu0 %v1830
        %2056 = vmatprep.mubr.bf16.mxu0 %v1539
        %2057 = vmatmul.mubr.bf16.gmra.mrb[0].mxu0 %v1538
        %v2058 = vpop.f32.mrb[0].mxu0
        %v2059 = vadd.f32 %v1898, %v2058
        %v2060 = vpop.f32.mrb[0].mxu0
        %v2061 = vpop.f32.mrb[0].mxu0
        %v2062 = vadd.f32 %v1901, %v2061
        %v2063 = vpop.f32.mrb[0].mxu0
        %2064 = vmatprep.mubr.bf16.mxu0 %v1543
        %2065 = vmatmul.mubr.bf16.gmra.mrb[0].mxu0 %v1542
        %v2066 = vpop.f32.mrb[0].mxu0
        %v2067 = vadd.f32 %v1906, %v2066
        %v2068 = vpop.f32.mrb[0].mxu0
        %v2069 = vpop.f32.mrb[0].mxu0
        %v2070 = vadd.f32 %v1909, %v2069
        %v2071 = vpop.f32.mrb[0].mxu0
        %2072 = vmatprep.mubr.bf16.mxu0 %v1547
        %2073 = vmatmul.mubr.bf16.gmra.mrb[0].mxu0 %v1546
        %v2074 = vpop.f32.mrb[0].mxu0
        %v2075 = vadd.f32 %v1914, %v2074
        %v2076 = vpop.f32.mrb[0].mxu0
        %v2077 = vpop.f32.mrb[0].mxu0
        %v2078 = vadd.f32 %v1917, %v2077
        %v2079 = vpop.f32.mrb[0].mxu0
        %2080 = vmatprep.mubr.bf16.mxu0 %v1551
        %2081 = vmatmul.mubr.bf16.gmra.mrb[0].mxu0 %v1550
        %v2082 = vpop.f32.mrb[0].mxu0
        %v2083 = vadd.f32 %v1922, %v2082
        %v2084 = vpop.f32.mrb[0].mxu0
        %v2085 = vpop.f32.mrb[0].mxu0
        %v2086 = vadd.f32 %v1925, %v2085
        %v2087 = vpop.f32.mrb[0].mxu0
        %2088 = vmatprep.mubr.bf16.mxu0 %v1555
        %2089 = vmatmul.mubr.bf16.gmra.mrb[0].mxu0 %v1554
        %v2090 = vpop.f32.mrb[0].mxu0
        %v2091 = vadd.f32 %v1930, %v2090
        %v2092 = vpop.f32.mrb[0].mxu0
        %v2093 = vpop.f32.mrb[0].mxu0
        %v2094 = vadd.f32 %v1933, %v2093
        %v2095 = vpop.f32.mrb[0].mxu0
        %2096 = vmatprep.mubr.bf16.mxu0 %v1559
        %2097 = vmatmul.mubr.bf16.gmra.mrb[0].mxu0 %v1558
        %v2098 = vpop.f32.mrb[0].mxu0
        %v2099 = vadd.f32 %v1938, %v2098
        %v2100 = vpop.f32.mrb[0].mxu0
        %v2101 = vpop.f32.mrb[0].mxu0
        %v2102 = vadd.f32 %v1941, %v2101
        %v2103 = vpop.f32.mrb[0].mxu0
        %2104 = vmatprep.mubr.bf16.mxu0 %v1563
        %2105 = vmatmul.mubr.bf16.gmra.mrb[0].mxu0 %v1562
        %v2106 = vpop.f32.mrb[0].mxu0
        %v2107 = vadd.f32 %v1946, %v2106
        %v2108 = vpop.f32.mrb[0].mxu0
        %v2109 = vpop.f32.mrb[0].mxu0
        %v2110 = vadd.f32 %v1949, %v2109
        %v2111 = vpop.f32.mrb[0].mxu0
        %2112 = vmatprep.mubr.bf16.mxu0 %v1567
        %2113 = vmatmul.mubr.bf16.gmra.mrb[0].mxu0 %v1566
        %v2114 = vpop.f32.mrb[0].mxu0
        %v2115 = vadd.f32 %v1954, %v2114
        %v2116 = vpop.f32.mrb[0].mxu0
        %v2117 = vpop.f32.mrb[0].mxu0
        %v2118 = vadd.f32 %v1957, %v2117
        %v2119 = vpop.f32.mrb[0].mxu0
        %2120 = vmatprep.mubr.bf16.mxu0 %v1571
        %2121 = vmatmul.mubr.bf16.gmra.mrb[0].mxu0 %v1570
        %v2122 = vpop.f32.mrb[0].mxu0
        %v2123 = vadd.f32 %v1962, %v2122
        %v2124 = vpop.f32.mrb[0].mxu0
        %v2125 = vpop.f32.mrb[0].mxu0
        %v2126 = vadd.f32 %v1965, %v2125
        %v2127 = vpop.f32.mrb[0].mxu0
        %2128 = vmatprep.mubr.bf16.mxu0 %v1575
        %2129 = vmatmul.mubr.bf16.gmra.mrb[0].mxu0 %v1574
        %v2130 = vpop.f32.mrb[0].mxu0
        %v2131 = vadd.f32 %v1970, %v2130
        %v2132 = vpop.f32.mrb[0].mxu0
        %v2133 = vpop.f32.mrb[0].mxu0
        %v2134 = vadd.f32 %v1973, %v2133
        %v2135 = vpop.f32.mrb[0].mxu0
        %2136 = vmatprep.mubr.bf16.mxu0 %v1579
        %2137 = vmatmul.mubr.bf16.gmra.mrb[0].mxu0 %v1578
        %v2138 = vpop.f32.mrb[0].mxu0
        %v2139 = vadd.f32 %v1978, %v2138
        %v2140 = vpop.f32.mrb[0].mxu0
        %v2141 = vpop.f32.mrb[0].mxu0
        %v2142 = vadd.f32 %v1981, %v2141
        %v2143 = vpop.f32.mrb[0].mxu0
        %2144 = vmatprep.mubr.bf16.mxu0 %v1583
        %2145 = vmatmul.mubr.bf16.gmra.mrb[0].mxu0 %v1582
        %v2146 = vpop.f32.mrb[0].mxu0
        %v2147 = vadd.f32 %v1986, %v2146
        %v2148 = vpop.f32.mrb[0].mxu0
        %v2149 = vpop.f32.mrb[0].mxu0
        %v2150 = vadd.f32 %v1989, %v2149
        %v2151 = vpop.f32.mrb[0].mxu0
        %2152 = vmatprep.mubr.bf16.mxu0 %v1587
        %2153 = vmatmul.mubr.bf16.gmra.mrb[0].mxu0 %v1586
        %v2154 = vpop.f32.mrb[0].mxu0
        %v2155 = vadd.f32 %v1994, %v2154
        %v2156 = vpop.f32.mrb[0].mxu0
        %v2157 = vpop.f32.mrb[0].mxu0
        %v2158 = vadd.f32 %v1997, %v2157
        %v2159 = vpop.f32.mrb[0].mxu0
        %2160 = vmatprep.mubr.bf16.mxu0 %v1591
        %2161 = vmatmul.mubr.bf16.gmra.mrb[0].mxu0 %v1590
        %v2162 = vpop.f32.mrb[0].mxu0
        %v2163 = vadd.f32 %v2002, %v2162
        %v2164 = vpop.f32.mrb[0].mxu0
        %v2165 = vpop.f32.mrb[0].mxu0
        %v2166 = vadd.f32 %v2005, %v2165
        %v2167 = vpop.f32.mrb[0].mxu0
        %2168 = vmatprep.mubr.bf16.mxu0 %v1595
        %2169 = vmatmul.mubr.bf16.gmra.mrb[0].mxu0 %v1594
        %v2170 = vpop.f32.mrb[0].mxu0
        %v2171 = vadd.f32 %v2010, %v2170
        %v2172 = vpop.f32.mrb[0].mxu0
        %v2173 = vpop.f32.mrb[0].mxu0
        %v2174 = vadd.f32 %v2013, %v2173
        %v2175 = vpop.f32.mrb[0].mxu0
        %2176 = vmatprep.mubr.bf16.mxu0 %v1599
        %2177 = vmatmul.mubr.bf16.gmra.mrb[0].mxu0 %v1598
        %v2178 = vpop.f32.mrb[0].mxu0
        %v2179 = vadd.f32 %v2018, %v2178
        %v2180 = vpop.f32.mrb[0].mxu0
        %v2181 = vpop.f32.mrb[0].mxu0
        %v2182 = vadd.f32 %v2021, %v2181
        %v2183 = vpop.f32.mrb[0].mxu0
        %2184 = vdwg.mxu0
        %2185 = vst [vmem:[%s325] sm:$0xff] %v2059
        %2186 = vst [vmem:[%s325 + $0x8] sm:$0xff] %v2062
        %2187 = vst [vmem:[%s325 + $0x10] sm:$0xff] %v2067
        %2188 = vst [vmem:[%s325 + $0x18] sm:$0xff] %v2070
        %2189 = vst [vmem:[%s325 + $0x20] sm:$0xff] %v2075
        %2190 = vst [vmem:[%s325 + $0x28] sm:$0xff] %v2078
        %2191 = vst [vmem:[%s325 + $0x30] sm:$0xff] %v2083
        %2192 = vst [vmem:[%s325 + $0x38] sm:$0xff] %v2086
        %2193 = vst [vmem:[%s325 + $0x40] sm:$0xff] %v2091
        %2194 = vst [vmem:[%s325 + $0x48] sm:$0xff] %v2094
        %2195 = vst [vmem:[%s325 + $0x50] sm:$0xff] %v2099
        %2196 = vst [vmem:[%s325 + $0x58] sm:$0xff] %v2102
        %2197 = vst [vmem:[%s325 + $0x60] sm:$0xff] %v2107
        %2198 = vst [vmem:[%s325 + $0x68] sm:$0xff] %v2110
        %2199 = vst [vmem:[%s325 + $0x70] sm:$0xff] %v2115
        %2200 = vst [vmem:[%s325 + $0x78] sm:$0xff] %v2118
        %2201 = vst [vmem:[%s325 + $0x80] sm:$0xff] %v2123
        %2202 = vst [vmem:[%s325 + $0x88] sm:$0xff] %v2126
        %2203 = vst [vmem:[%s325 + $0x90] sm:$0xff] %v2131
        %2204 = vst [vmem:[%s325 + $0x98] sm:$0xff] %v2134
        %2205 = vst [vmem:[%s325 + $0xa0] sm:$0xff] %v2139
        %2206 = vst [vmem:[%s325 + $0xa8] sm:$0xff] %v2142
        %2207 = vst [vmem:[%s325 + $0xb0] sm:$0xff] %v2147
        %2208 = vst [vmem:[%s325 + $0xb8] sm:$0xff] %v2150
        %2209 = vst [vmem:[%s325 + $0xc0] sm:$0xff] %v2155
        %2210 = vst [vmem:[%s325 + $0xc8] sm:$0xff] %v2158
        %2211 = vst [vmem:[%s325 + $0xd0] sm:$0xff] %v2163
        %2212 = vst [vmem:[%s325 + $0xd8] sm:$0xff] %v2166
        %2213 = vst [vmem:[%s325 + $0xe0] sm:$0xff] %v2171
        %2214 = vst [vmem:[%s325 + $0xe8] sm:$0xff] %v2174
        %2215 = vst [vmem:[%s325 + $0xf0] sm:$0xff] %v2179
        %2216 = vst [vmem:[%s325 + $0xf8] sm:$0xff] %v2182
        %s2217 = sand.u32 %s185, 1
        %s2218 = scalar_lea.sflag [#allocation4], %s2217
        %s2219 = sand.u32 %s185, 1
        %s2220 = smul.addr %s2219, 256
        %s2221 = scalar_lea.vmem [#allocation8], %s2220
        // Predicated region
        $region61: #{tpu_custom_call.1} parent=47 // pred_check
          %p2222 = pneg %p195
        $region62: #{tpu_custom_call.1} parent=47 // pred_check_branch
          %2224 = sbr.rel (%p2222) target = $region64
        $region63: #{tpu_custom_call.1} parent=47 // pred_region
          %s2225 = smul.u32 32, %s25
          %s2227 = ssub.s32 4096, 4096
          %2228 = vsyncadd %s2218, %s2227
          %s2229 = smul.addr %s2225, 128
          %s2230 = scalar_lea.hbm %s7, %s2229
          %s2231 = sshll.u32 %s2221, 4
          %s2232 = int_to_ptr.vmem [resolvable:$true] %s2231
          %2237 = dma.vmem_to_hbm [thread:$0]  %s2232, 4096, %s2230, %s2218, 128, 128, 8
        $region64: #{tpu_custom_call.1} parent=47 // pred_fallthru
          _
      $region48: #{tpu_custom_call.1} parent=5 // pred_fallthru
        _
      %p2238 = scmp.le.s32.totalorder 2, %s20
      // Predicated region
      $region65: #{tpu_custom_call.1} parent=5 // pred_check
        %p2239 = pneg %p2238
      $region66: #{tpu_custom_call.1} parent=5 // pred_check_branch
        %2241 = sbr.rel (%p2239) target = $region68
      $region67: #{tpu_custom_call.1} parent=5 // pred_region
        %s2242 = ssub.s32 %s20, 2
        // Predicated region
        $region69: #{tpu_custom_call.1} parent=67 // pred_check
          %p2243 = pneg %p201
        $region70: #{tpu_custom_call.1} parent=67 // pred_check_branch
          %2245 = sbr.rel (%p2243) target = $region72
        $region71: #{tpu_custom_call.1} parent=67 // pred_region
          %s2246 = sand.u32 %s186, 1
          %s2247 = scalar_lea.sflag [#allocation4], %s2246
          %s2248 = sand.u32 %s186, 1
          %s2249 = smul.addr %s2248, 256
          %s2250 = scalar_lea.vmem [#allocation8], %s2249
          %2251 = dma.done %s2247, 4096
        $region72: #{tpu_custom_call.1} parent=67 // pred_fallthru
          _
      $region68: #{tpu_custom_call.1} parent=5 // pred_fallthru
        _
    $region6: #{tpu_custom_call.1} parent=1 // loop_footer
      %s24 = sadd.s32 1, %s20
    $region7: #{tpu_custom_call.1} parent=1 // loop_footer_branch
      %19 = sbr.rel target = $region3
    $region8: #{tpu_custom_call.1} parent=1 // loop_exit
      _
    %2252 = vsyncpa [#allocation3], 1
    %s2253 = scalar_lea.sflag [#allocation3], 1
    %2254 = vsyncpa %s2253, 1
    %2255 = vsyncpa [#allocation6], 1
    %2256 = vsyncpa [#allocation4], 1
    %s2257 = scalar_lea.sflag [#allocation4], 1
    %2258 = vsyncpa %s2257, 1

</llo_original>
